<compile_context>
chip_gen: v7x
topology: tpu7x:2x2x1
jax: 0.10.0
libtpu: 0.0.40
codegen_flags: <defaults>
</compile_context>

<pallas_src>
import functools

import jax
import jax.numpy as jnp
import numpy as np
from jax.experimental import pallas as pl
from jax.experimental.pallas import tpu as pltpu


def _const2(i):
    return (0, 0)


def _batch3(i):
    return (i, 0, 0)


# ----------------------------------------------------------------------------
# Fused whole-network kernel (one grid step == one sample)
# ----------------------------------------------------------------------------
def _convnet_kernel(*refs, depth, eps):
    """refs = [x, s_in, (w, b, gamma, beta, poolpad) * depth,
               fc_cat, fc_mask, fc_sel, fc_b, out]"""
    x_ref, s_in_ref = refs[0], refs[1]
    layer_refs = refs[2:2 + 5 * depth]
    fc_cat_ref, fc_mask_ref, fc_sel_ref, fc_b_ref, o_ref = refs[2 + 5 * depth:]

    # layer-0 zero padding via a constant (L, L + 2*pad) shift/embed matrix.
    xp = jnp.dot(x_ref[0], s_in_ref[...], preferred_element_type=jnp.float32)

    for d in range(depth):
        w_ref, b_ref, g_ref, be_ref, pp_ref = layer_refs[5 * d:5 * (d + 1)]
        l_out = xp.shape[1] - 2                       # valid conv outputs (k=3)

        # im2col: one (Cout, 3*Cin) x (3*Cin, l_out) bf16 MXU matmul, f32 acc.
        slab = jnp.concatenate([xp[:, k:k + l_out] for k in range(3)], axis=0)
        y = jnp.dot(w_ref[...], slab.astype(jnp.bfloat16),
                    preferred_element_type=jnp.float32)
        y = y + b_ref[...]

        # instancenorm == GroupNorm(C, C): per-sample per-channel stats (f32).
        mean = jnp.mean(y, axis=1, keepdims=True)
        var = jnp.mean((y - mean) * (y - mean), axis=1, keepdims=True)
        y = (y - mean) * jax.lax.rsqrt(var + eps)
        y = y * g_ref[...] + be_ref[...]

        y = jnp.maximum(y, 0.0)                       # ReLU

        # AvgPool1d(2,2) fused with the NEXT layer's zero padding: one constant
        # matmul (0.5 entries, already shifted by the next pad).
        xp = jnp.dot(y, pp_ref[...], preferred_element_type=jnp.float32)

    h = xp                                            # (C_last, L_final), f32

    # classifier (flatten + Linear) without reshaping (C, L) -> (1, C*L):
    #   z[c, c'*N + n] = sum_l h[c, l] * Wfc[c'*L + l, n]
    #   keep the diagonal blocks (c == c'), sum over c, fold with selector.
    z = jnp.dot(h, fc_cat_ref[...], preferred_element_type=jnp.float32)
    s = jnp.sum(z * fc_mask_ref[...], axis=0, keepdims=True)
    logits = jnp.dot(s, fc_sel_ref[...], preferred_element_type=jnp.float32)
    logits = logits + fc_b_ref[...]
    o_ref[0] = logits.astype(o_ref.dtype)


# ----------------------------------------------------------------------------
# Wrapper: builds all hoisted constant matrices and the single pallas_call
# ----------------------------------------------------------------------------
def convnet_forward(x, params):
    B, c_in0, L = x.shape
    depth = len(params["convs"])
    N = params["fc_b"].shape[-1]

    inputs = [x]
    in_specs = [pl.BlockSpec((1, c_in0, L), _batch3)]

    def add_const(arr):
        inputs.append(arr)
        in_specs.append(pl.BlockSpec(arr.shape, _const2))

    # layer-0 padding matrix: embeds length L into L + 2*pad0 (zeros at edges).
    pad0 = 3
    lp0 = L + 2 * pad0
    s_in = np.zeros((L, lp0), np.float32)
    s_in[np.arange(L), np.arange(L) + pad0] = 1.0
    add_const(jnp.asarray(s_in))

    l_cur = lp0                                   # padded length entering layer 0
    for d, p in enumerate(params["convs"]):
        cout, cin, _ = p["w"].shape
        # (Cout, Cin, 3) -> (Cout, 3*Cin), tap-major along the contraction.
        w_flat = jnp.transpose(p["w"], (0, 2, 1)).reshape(cout, 3 * cin)
        w_flat = w_flat.astype(jnp.bfloat16)      # bf16 MXU operands (f32 acc)

        l_out = l_cur - 2
        l_half = l_out // 2
        pad_next = 1 if d + 1 < depth else 0
        # combined AvgPool(2,2) + next-layer zero padding matrix.
        pp = np.zeros((l_out, l_half + 2 * pad_next), np.float32)
        pp[np.arange(2 * l_half), np.arange(2 * l_half) // 2 + pad_next] = 0.5

        add_const(w_flat)
        add_const(p["b"])
        add_const(p["gamma"])
        add_const(p["beta"])
        add_const(jnp.asarray(pp))
        l_cur = l_half + 2 * pad_next

    l_final = l_cur
    c_last = params["convs"][-1]["w"].shape[0]

    # classifier helper matrices (flatten order matches torch .view(B, -1)).
    fc_w_t = params["fc_w_t"]                                   # (c_last*l_final, N)
    fc_cat = fc_w_t.reshape(c_last, l_final, N).transpose(1, 0, 2)
    fc_cat = fc_cat.reshape(l_final, c_last * N)                # (L, C*N)
    fc_mask = jnp.asarray(np.repeat(np.eye(c_last, dtype=np.float32), N, axis=1))
    fc_sel = jnp.asarray(np.tile(np.eye(N, dtype=np.float32), (c_last, 1)))
    add_const(fc_cat)
    add_const(fc_mask)
    add_const(fc_sel)
    add_const(params["fc_b"])

    kernel = functools.partial(_convnet_kernel, depth=depth, eps=1e-5)
    out = pl.pallas_call(
        kernel,
        out_shape=jax.ShapeDtypeStruct((B, 1, N), jnp.float32),
        grid_spec=pltpu.PrefetchScalarGridSpec(
            num_scalar_prefetch=0,
            grid=(B,),
            in_specs=in_specs,
            out_specs=pl.BlockSpec((1, 1, N), _batch3),
        ),
        compiler_params=pltpu.CompilerParams(
            dimension_semantics=("parallel",)),
    )(*inputs)
    return out.reshape(B, N)


# ----------------------------------------------------------------------------
# Parameter init (classifier sized to the actual flattened feature length)
# ----------------------------------------------------------------------------
def init_params(key, num_classes, net_width, net_depth, in_size):
    in_channels = 64
    L = in_size
    convs = []
    for d in range(net_depth):
        key, k1, k2 = jax.random.split(key, 3)
        fan_in = in_channels * 3
        w = jax.random.normal(k1, (net_width, in_channels, 3),
                              jnp.float32) / jnp.sqrt(float(fan_in))
        b = jax.random.normal(k2, (net_width, 1), jnp.float32) * 0.01
        gamma = jnp.ones((net_width, 1), jnp.float32)
        beta = jnp.zeros((net_width, 1), jnp.float32)
        convs.append(dict(w=w, b=b, gamma=gamma, beta=beta))
        pad = 3 if d == 0 else 1
        L = (L + 2 * pad - 2) // 2                # conv (k=3, stride 1) then pool(2,2)
        in_channels = net_width
    num_feat = net_width * L
    key, k1, k2 = jax.random.split(key, 3)
    fc_w_t = jax.random.normal(k1, (num_feat, num_classes),
                               jnp.float32) / jnp.sqrt(float(num_feat))
    fc_b = jax.random.normal(k2, (1, num_classes), jnp.float32) * 0.01
    return dict(convs=convs, fc_w_t=fc_w_t, fc_b=fc_b)


# ----------------------------------------------------------------------------
# Pure-JAX reference (PyTorch semantics).  dot_dtype=bfloat16 reproduces the
# kernel's MXU-operand rounding for a tight structural check.
# ----------------------------------------------------------------------------
def reference_forward(x, params, *, dot_dtype=jnp.float32):
    hi = jax.lax.Precision.HIGHEST
    out = x
    for d, p in enumerate(params["convs"]):
        pad = 3 if d == 0 else 1
        xp = jnp.pad(out, ((0, 0), (0, 0), (pad, pad)))
        l_out = xp.shape[-1] - 2
        w = p["w"].astype(dot_dtype)
        y = sum(jnp.einsum("oc,bcl->bol", w[:, :, k],
                           xp[:, :, k:k + l_out].astype(dot_dtype),
                           preferred_element_type=jnp.float32, precision=hi)
                for k in range(3))
        y = y + p["b"][None]
        mean = y.mean(axis=2, keepdims=True)
        var = ((y - mean) ** 2).mean(axis=2, keepdims=True)
        y = (y - mean) * jax.lax.rsqrt(var + 1e-5)
        y = y * p["gamma"][None] + p["beta"][None]
        y = jnp.maximum(y, 0.0)
        l_half = y.shape[-1] // 2
        y = (y[:, :, 0:2 * l_half:2] + y[:, :, 1:2 * l_half:2]) * 0.5
        out = y
    flat = out.reshape(out.shape[0], -1)
    return jnp.dot(flat, params["fc_w_t"], precision=hi) + params["fc_b"]


if __name__ == "__main__":
    # config: num_classes=10, net_width=64, net_depth=2, net_act='relu',
    #         net_norm='instancenorm', net_pooling='avgpooling', in_size=32
    num_classes, net_width, net_depth, in_size = 10, 64, 2, 32
    batch = 2

    key = jax.random.PRNGKey(0)
    key, kx = jax.random.split(key)
    x = jax.random.normal(kx, (batch, 64, in_size), jnp.float32)  # NCL, C=64 fixed
    params = init_params(key, num_classes, net_width, net_depth, in_size)

    fwd = jax.jit(convnet_forward)
    out = jax.block_until_ready(fwd(x, params))

    # Tight structural check: reference with the same bf16-rounded MXU operands.
    ref_bf16 = reference_forward(x, params, dot_dtype=jnp.bfloat16)
    np.testing.assert_allclose(np.asarray(out), np.asarray(ref_bf16),
                               rtol=1e-3, atol=1e-3)

    # Loose sanity check vs the full-f32 reference (bf16 conv operands introduce
    # ~1e-2-level differences by design).
    ref_f32 = reference_forward(x, params, dot_dtype=jnp.float32)
    np.testing.assert_allclose(np.asarray(out), np.asarray(ref_f32),
                               rtol=5e-2, atol=5e-2)

    print("KERNEL_OK")
</pallas_src>

<mosaic_0001>
module attributes {stable_mosaic.version = 11 : i64} {
  func.func @_convnet_kernel(%arg0: i32, %arg1: memref<1x64x32xf32, #tpu.memory_space<vmem>>, %arg2: memref<32x38xf32, #tpu.memory_space<vmem>>, %arg3: memref<64x192xbf16, #tpu.memory_space<vmem>>, %arg4: memref<64x1xf32, #tpu.memory_space<vmem>>, %arg5: memref<64x1xf32, #tpu.memory_space<vmem>>, %arg6: memref<64x1xf32, #tpu.memory_space<vmem>>, %arg7: memref<36x20xf32, #tpu.memory_space<vmem>>, %arg8: memref<64x192xbf16, #tpu.memory_space<vmem>>, %arg9: memref<64x1xf32, #tpu.memory_space<vmem>>, %arg10: memref<64x1xf32, #tpu.memory_space<vmem>>, %arg11: memref<64x1xf32, #tpu.memory_space<vmem>>, %arg12: memref<18x9xf32, #tpu.memory_space<vmem>>, %arg13: memref<9x640xf32, #tpu.memory_space<vmem>>, %arg14: memref<64x640xf32, #tpu.memory_space<vmem>>, %arg15: memref<640x10xf32, #tpu.memory_space<vmem>>, %arg16: memref<1x10xf32, #tpu.memory_space<vmem>>, %arg17: memref<1x1x10xf32, #tpu.memory_space<vmem>>) attributes {dimension_semantics = [#tpu.dimension_semantics<parallel>], iteration_bounds = array<i64: 2>, scalar_prefetch = 0 : i64, scratch_operands = 0 : i64, tpu.core_type = #tpu.core_type<tc>, window_params = [{transform_indices = @transform_0, window_bounds = array<i64: 1, 64, 32>}, {pipeline_mode = #tpu.pipeline_mode<synchronous>, transform_indices = @transform_1, window_bounds = array<i64: 32, 38>}, {pipeline_mode = #tpu.pipeline_mode<synchronous>, transform_indices = @transform_2, window_bounds = array<i64: 64, 192>}, {pipeline_mode = #tpu.pipeline_mode<synchronous>, transform_indices = @transform_3, window_bounds = array<i64: 64, 1>}, {pipeline_mode = #tpu.pipeline_mode<synchronous>, transform_indices = @transform_4, window_bounds = array<i64: 64, 1>}, {pipeline_mode = #tpu.pipeline_mode<synchronous>, transform_indices = @transform_5, window_bounds = array<i64: 64, 1>}, {pipeline_mode = #tpu.pipeline_mode<synchronous>, transform_indices = @transform_6, window_bounds = array<i64: 36, 20>}, {pipeline_mode = #tpu.pipeline_mode<synchronous>, transform_indices = @transform_7, window_bounds = array<i64: 64, 192>}, {pipeline_mode = #tpu.pipeline_mode<synchronous>, transform_indices = @transform_8, window_bounds = array<i64: 64, 1>}, {pipeline_mode = #tpu.pipeline_mode<synchronous>, transform_indices = @transform_9, window_bounds = array<i64: 64, 1>}, {pipeline_mode = #tpu.pipeline_mode<synchronous>, transform_indices = @transform_10, window_bounds = array<i64: 64, 1>}, {pipeline_mode = #tpu.pipeline_mode<synchronous>, transform_indices = @transform_11, window_bounds = array<i64: 18, 9>}, {pipeline_mode = #tpu.pipeline_mode<synchronous>, transform_indices = @transform_12, window_bounds = array<i64: 9, 640>}, {pipeline_mode = #tpu.pipeline_mode<synchronous>, transform_indices = @transform_13, window_bounds = array<i64: 64, 640>}, {pipeline_mode = #tpu.pipeline_mode<synchronous>, transform_indices = @transform_14, window_bounds = array<i64: 640, 10>}, {pipeline_mode = #tpu.pipeline_mode<synchronous>, transform_indices = @transform_15, window_bounds = array<i64: 1, 10>}, {transform_indices = @transform_16, window_bounds = array<i64: 1, 1, 10>}]} {
    %c0 = arith.constant 0 : index
    %c0_0 = arith.constant 0 : index
    %c0_1 = arith.constant 0 : index
    %0 = vector.load %arg1[%c0, %c0_0, %c0_1] : memref<1x64x32xf32, #tpu.memory_space<vmem>>, vector<1x64x32xf32>
    %1 = vector.shape_cast %0 : vector<1x64x32xf32> to vector<64x32xf32>
    %c0_2 = arith.constant 0 : index
    %c0_3 = arith.constant 0 : index
    %2 = vector.load %arg2[%c0_2, %c0_3] : memref<32x38xf32, #tpu.memory_space<vmem>>, vector<32x38xf32>
    %cst = arith.constant dense<0.000000e+00> : vector<64x38xf32>
    %3 = tpu.matmul %1, %2, %cst {dimension_numbers = #tpu.dot_dimension_numbers<[1], [0], [0], [1], [0, 0, 1, 1], [], []>} : vector<64x32xf32>, vector<32x38xf32>, vector<64x38xf32> -> vector<64x38xf32>
    %4 = vector.extract_strided_slice %3 {offsets = [0, 0], sizes = [64, 36], strides = [1, 1]} : vector<64x38xf32> to vector<64x36xf32>
    %5 = vector.extract_strided_slice %3 {offsets = [0, 1], sizes = [64, 36], strides = [1, 1]} : vector<64x38xf32> to vector<64x36xf32>
    %6 = vector.extract_strided_slice %3 {offsets = [0, 2], sizes = [64, 36], strides = [1, 1]} : vector<64x38xf32> to vector<64x36xf32>
    %7 = tpu.concatenate %4, %5, %6 in 0 : vector<64x36xf32>, vector<64x36xf32>, vector<64x36xf32> -> vector<192x36xf32>
    %c0_4 = arith.constant 0 : index
    %c0_5 = arith.constant 0 : index
    %8 = vector.load %arg3[%c0_4, %c0_5] : memref<64x192xbf16, #tpu.memory_space<vmem>>, vector<64x192xbf16>
    %9 = arith.truncf %7 : vector<192x36xf32> to vector<192x36xbf16>
    %cst_6 = arith.constant dense<0.000000e+00> : vector<64x36xf32>
    %10 = tpu.matmul %8, %9, %cst_6 {dimension_numbers = #tpu.dot_dimension_numbers<[1], [0], [0], [1], [0, 0, 1, 1], [], []>} : vector<64x192xbf16>, vector<192x36xbf16>, vector<64x36xf32> -> vector<64x36xf32>
    %c0_7 = arith.constant 0 : index
    %c0_8 = arith.constant 0 : index
    %11 = vector.load %arg4[%c0_7, %c0_8] : memref<64x1xf32, #tpu.memory_space<vmem>>, vector<64x1xf32>
    %12 = vector.broadcast %11 : vector<64x1xf32> to vector<64x36xf32>
    %13 = arith.addf %10, %12 : vector<64x36xf32>
    %cst_9 = arith.constant dense<0.000000e+00> : vector<64xf32>
    %14 = vector.multi_reduction <add>, %13, %cst_9 [1] : vector<64x36xf32> to vector<64xf32>
    %15 = vector.shape_cast %14 : vector<64xf32> to vector<64x1xf32>
    %cst_10 = arith.constant 3.600000e+01 : f32
    %16 = vector.broadcast %cst_10 : f32 to vector<64x1xf32>
    %17 = arith.divf %15, %16 : vector<64x1xf32>
    %18 = vector.broadcast %17 : vector<64x1xf32> to vector<64x36xf32>
    %19 = arith.subf %13, %18 : vector<64x36xf32>
    %20 = vector.broadcast %17 : vector<64x1xf32> to vector<64x36xf32>
    %21 = arith.subf %13, %20 : vector<64x36xf32>
    %22 = arith.mulf %19, %21 : vector<64x36xf32>
    %cst_11 = arith.constant dense<0.000000e+00> : vector<64xf32>
    %23 = vector.multi_reduction <add>, %22, %cst_11 [1] : vector<64x36xf32> to vector<64xf32>
    %24 = vector.shape_cast %23 : vector<64xf32> to vector<64x1xf32>
    %cst_12 = arith.constant 3.600000e+01 : f32
    %25 = vector.broadcast %cst_12 : f32 to vector<64x1xf32>
    %26 = arith.divf %24, %25 : vector<64x1xf32>
    %27 = vector.broadcast %17 : vector<64x1xf32> to vector<64x36xf32>
    %28 = arith.subf %13, %27 : vector<64x36xf32>
    %cst_13 = arith.constant 9.99999974E-6 : f32
    %29 = vector.broadcast %cst_13 : f32 to vector<64x1xf32>
    %30 = arith.addf %26, %29 : vector<64x1xf32>
    %31 = math.rsqrt %30 : vector<64x1xf32>
    %32 = vector.broadcast %31 : vector<64x1xf32> to vector<64x36xf32>
    %33 = arith.mulf %28, %32 : vector<64x36xf32>
    %c0_14 = arith.constant 0 : index
    %c0_15 = arith.constant 0 : index
    %34 = vector.load %arg5[%c0_14, %c0_15] : memref<64x1xf32, #tpu.memory_space<vmem>>, vector<64x1xf32>
    %35 = vector.broadcast %34 : vector<64x1xf32> to vector<64x36xf32>
    %36 = arith.mulf %33, %35 : vector<64x36xf32>
    %c0_16 = arith.constant 0 : index
    %c0_17 = arith.constant 0 : index
    %37 = vector.load %arg6[%c0_16, %c0_17] : memref<64x1xf32, #tpu.memory_space<vmem>>, vector<64x1xf32>
    %38 = vector.broadcast %37 : vector<64x1xf32> to vector<64x36xf32>
    %39 = arith.addf %36, %38 : vector<64x36xf32>
    %cst_18 = arith.constant 0.000000e+00 : f32
    %40 = vector.broadcast %cst_18 : f32 to vector<64x36xf32>
    %41 = arith.maximumf %39, %40 : vector<64x36xf32>
    %c0_19 = arith.constant 0 : index
    %c0_20 = arith.constant 0 : index
    %42 = vector.load %arg7[%c0_19, %c0_20] : memref<36x20xf32, #tpu.memory_space<vmem>>, vector<36x20xf32>
    %cst_21 = arith.constant dense<0.000000e+00> : vector<64x20xf32>
    %43 = tpu.matmul %41, %42, %cst_21 {dimension_numbers = #tpu.dot_dimension_numbers<[1], [0], [0], [1], [0, 0, 1, 1], [], []>} : vector<64x36xf32>, vector<36x20xf32>, vector<64x20xf32> -> vector<64x20xf32>
    %44 = vector.extract_strided_slice %43 {offsets = [0, 0], sizes = [64, 18], strides = [1, 1]} : vector<64x20xf32> to vector<64x18xf32>
    %45 = vector.extract_strided_slice %43 {offsets = [0, 1], sizes = [64, 18], strides = [1, 1]} : vector<64x20xf32> to vector<64x18xf32>
    %46 = vector.extract_strided_slice %43 {offsets = [0, 2], sizes = [64, 18], strides = [1, 1]} : vector<64x20xf32> to vector<64x18xf32>
    %47 = tpu.concatenate %44, %45, %46 in 0 : vector<64x18xf32>, vector<64x18xf32>, vector<64x18xf32> -> vector<192x18xf32>
    %c0_22 = arith.constant 0 : index
    %c0_23 = arith.constant 0 : index
    %48 = vector.load %arg8[%c0_22, %c0_23] : memref<64x192xbf16, #tpu.memory_space<vmem>>, vector<64x192xbf16>
    %49 = arith.truncf %47 : vector<192x18xf32> to vector<192x18xbf16>
    %cst_24 = arith.constant dense<0.000000e+00> : vector<64x18xf32>
    %50 = tpu.matmul %48, %49, %cst_24 {dimension_numbers = #tpu.dot_dimension_numbers<[1], [0], [0], [1], [0, 0, 1, 1], [], []>} : vector<64x192xbf16>, vector<192x18xbf16>, vector<64x18xf32> -> vector<64x18xf32>
    %c0_25 = arith.constant 0 : index
    %c0_26 = arith.constant 0 : index
    %51 = vector.load %arg9[%c0_25, %c0_26] : memref<64x1xf32, #tpu.memory_space<vmem>>, vector<64x1xf32>
    %52 = vector.broadcast %51 : vector<64x1xf32> to vector<64x18xf32>
    %53 = arith.addf %50, %52 : vector<64x18xf32>
    %cst_27 = arith.constant dense<0.000000e+00> : vector<64xf32>
    %54 = vector.multi_reduction <add>, %53, %cst_27 [1] : vector<64x18xf32> to vector<64xf32>
    %55 = vector.shape_cast %54 : vector<64xf32> to vector<64x1xf32>
    %cst_28 = arith.constant 1.800000e+01 : f32
    %56 = vector.broadcast %cst_28 : f32 to vector<64x1xf32>
    %57 = arith.divf %55, %56 : vector<64x1xf32>
    %58 = vector.broadcast %57 : vector<64x1xf32> to vector<64x18xf32>
    %59 = arith.subf %53, %58 : vector<64x18xf32>
    %60 = vector.broadcast %57 : vector<64x1xf32> to vector<64x18xf32>
    %61 = arith.subf %53, %60 : vector<64x18xf32>
    %62 = arith.mulf %59, %61 : vector<64x18xf32>
    %cst_29 = arith.constant dense<0.000000e+00> : vector<64xf32>
    %63 = vector.multi_reduction <add>, %62, %cst_29 [1] : vector<64x18xf32> to vector<64xf32>
    %64 = vector.shape_cast %63 : vector<64xf32> to vector<64x1xf32>
    %cst_30 = arith.constant 1.800000e+01 : f32
    %65 = vector.broadcast %cst_30 : f32 to vector<64x1xf32>
    %66 = arith.divf %64, %65 : vector<64x1xf32>
    %67 = vector.broadcast %57 : vector<64x1xf32> to vector<64x18xf32>
    %68 = arith.subf %53, %67 : vector<64x18xf32>
    %cst_31 = arith.constant 9.99999974E-6 : f32
    %69 = vector.broadcast %cst_31 : f32 to vector<64x1xf32>
    %70 = arith.addf %66, %69 : vector<64x1xf32>
    %71 = math.rsqrt %70 : vector<64x1xf32>
    %72 = vector.broadcast %71 : vector<64x1xf32> to vector<64x18xf32>
    %73 = arith.mulf %68, %72 : vector<64x18xf32>
    %c0_32 = arith.constant 0 : index
    %c0_33 = arith.constant 0 : index
    %74 = vector.load %arg10[%c0_32, %c0_33] : memref<64x1xf32, #tpu.memory_space<vmem>>, vector<64x1xf32>
    %75 = vector.broadcast %74 : vector<64x1xf32> to vector<64x18xf32>
    %76 = arith.mulf %73, %75 : vector<64x18xf32>
    %c0_34 = arith.constant 0 : index
    %c0_35 = arith.constant 0 : index
    %77 = vector.load %arg11[%c0_34, %c0_35] : memref<64x1xf32, #tpu.memory_space<vmem>>, vector<64x1xf32>
    %78 = vector.broadcast %77 : vector<64x1xf32> to vector<64x18xf32>
    %79 = arith.addf %76, %78 : vector<64x18xf32>
    %cst_36 = arith.constant 0.000000e+00 : f32
    %80 = vector.broadcast %cst_36 : f32 to vector<64x18xf32>
    %81 = arith.maximumf %79, %80 : vector<64x18xf32>
    %c0_37 = arith.constant 0 : index
    %c0_38 = arith.constant 0 : index
    %82 = vector.load %arg12[%c0_37, %c0_38] : memref<18x9xf32, #tpu.memory_space<vmem>>, vector<18x9xf32>
    %cst_39 = arith.constant dense<0.000000e+00> : vector<64x9xf32>
    %83 = tpu.matmul %81, %82, %cst_39 {dimension_numbers = #tpu.dot_dimension_numbers<[1], [0], [0], [1], [0, 0, 1, 1], [], []>} : vector<64x18xf32>, vector<18x9xf32>, vector<64x9xf32> -> vector<64x9xf32>
    %c0_40 = arith.constant 0 : index
    %c0_41 = arith.constant 0 : index
    %84 = vector.load %arg13[%c0_40, %c0_41] : memref<9x640xf32, #tpu.memory_space<vmem>>, vector<9x640xf32>
    %cst_42 = arith.constant dense<0.000000e+00> : vector<64x640xf32>
    %85 = tpu.matmul %83, %84, %cst_42 {dimension_numbers = #tpu.dot_dimension_numbers<[1], [0], [0], [1], [0, 0, 1, 1], [], []>} : vector<64x9xf32>, vector<9x640xf32>, vector<64x640xf32> -> vector<64x640xf32>
    %c0_43 = arith.constant 0 : index
    %c0_44 = arith.constant 0 : index
    %86 = vector.load %arg14[%c0_43, %c0_44] : memref<64x640xf32, #tpu.memory_space<vmem>>, vector<64x640xf32>
    %87 = arith.mulf %85, %86 : vector<64x640xf32>
    %cst_45 = arith.constant dense<0.000000e+00> : vector<640xf32>
    %88 = vector.multi_reduction <add>, %87, %cst_45 [0] : vector<64x640xf32> to vector<640xf32>
    %89 = vector.shape_cast %88 : vector<640xf32> to vector<1x640xf32>
    %c0_46 = arith.constant 0 : index
    %c0_47 = arith.constant 0 : index
    %90 = vector.load %arg15[%c0_46, %c0_47] : memref<640x10xf32, #tpu.memory_space<vmem>>, vector<640x10xf32>
    %cst_48 = arith.constant dense<0.000000e+00> : vector<1x10xf32>
    %91 = tpu.matmul %89, %90, %cst_48 {dimension_numbers = #tpu.dot_dimension_numbers<[1], [0], [0], [1], [0, 0, 1, 1], [], []>} : vector<1x640xf32>, vector<640x10xf32>, vector<1x10xf32> -> vector<1x10xf32>
    %c0_49 = arith.constant 0 : index
    %c0_50 = arith.constant 0 : index
    %92 = vector.load %arg16[%c0_49, %c0_50] : memref<1x10xf32, #tpu.memory_space<vmem>>, vector<1x10xf32>
    %93 = arith.addf %91, %92 : vector<1x10xf32>
    %c0_51 = arith.constant 0 : index
    %c0_52 = arith.constant 0 : index
    %c0_53 = arith.constant 0 : index
    %94 = vector.load %arg17[%c0_51, %c0_52, %c0_53] : memref<1x1x10xf32, #tpu.memory_space<vmem>>, vector<1x1x10xf32>
    %95 = vector.shape_cast %94 : vector<1x1x10xf32> to vector<1x10xf32>
    %96 = vector.shape_cast %93 : vector<1x10xf32> to vector<1x1x10xf32>
    tpu.vector_store %arg17[%c0_51, %c0_52, %c0_53], %96 {strides = array<i32>} : memref<1x1x10xf32, #tpu.memory_space<vmem>>, vector<1x1x10xf32>,
    return
  }
  func.func @transform_0(%arg0: i32) -> (i32, i32, i32) {
    %c0_i32 = arith.constant 0 : i32
    %c0_i32_0 = arith.constant 0 : i32
    %c0_i32_1 = arith.constant 0 : i32
    return %arg0, %c0_i32, %c0_i32_0 : i32, i32, i32
  }
  func.func @transform_1(%arg0: i32) -> (i32, i32) {
    %c0_i32 = arith.constant 0 : i32
    %c0_i32_0 = arith.constant 0 : i32
    %c0_i32_1 = arith.constant 0 : i32
    return %c0_i32, %c0_i32_0 : i32, i32
  }
  func.func @transform_2(%arg0: i32) -> (i32, i32) {
    %c0_i32 = arith.constant 0 : i32
    %c0_i32_0 = arith.constant 0 : i32
    %c0_i32_1 = arith.constant 0 : i32
    return %c0_i32, %c0_i32_0 : i32, i32
  }
  func.func @transform_3(%arg0: i32) -> (i32, i32) {
    %c0_i32 = arith.constant 0 : i32
    %c0_i32_0 = arith.constant 0 : i32
    %c0_i32_1 = arith.constant 0 : i32
    return %c0_i32, %c0_i32_0 : i32, i32
  }
  func.func @transform_4(%arg0: i32) -> (i32, i32) {
    %c0_i32 = arith.constant 0 : i32
    %c0_i32_0 = arith.constant 0 : i32
    %c0_i32_1 = arith.constant 0 : i32
    return %c0_i32, %c0_i32_0 : i32, i32
  }
  func.func @transform_5(%arg0: i32) -> (i32, i32) {
    %c0_i32 = arith.constant 0 : i32
    %c0_i32_0 = arith.constant 0 : i32
    %c0_i32_1 = arith.constant 0 : i32
    return %c0_i32, %c0_i32_0 : i32, i32
  }
  func.func @transform_6(%arg0: i32) -> (i32, i32) {
    %c0_i32 = arith.constant 0 : i32
    %c0_i32_0 = arith.constant 0 : i32
    %c0_i32_1 = arith.constant 0 : i32
    return %c0_i32, %c0_i32_0 : i32, i32
  }
  func.func @transform_7(%arg0: i32) -> (i32, i32) {
    %c0_i32 = arith.constant 0 : i32
    %c0_i32_0 = arith.constant 0 : i32
    %c0_i32_1 = arith.constant 0 : i32
    return %c0_i32, %c0_i32_0 : i32, i32
  }
  func.func @transform_8(%arg0: i32) -> (i32, i32) {
    %c0_i32 = arith.constant 0 : i32
    %c0_i32_0 = arith.constant 0 : i32
    %c0_i32_1 = arith.constant 0 : i32
    return %c0_i32, %c0_i32_0 : i32, i32
  }
  func.func @transform_9(%arg0: i32) -> (i32, i32) {
    %c0_i32 = arith.constant 0 : i32
    %c0_i32_0 = arith.constant 0 : i32
    %c0_i32_1 = arith.constant 0 : i32
    return %c0_i32, %c0_i32_0 : i32, i32
  }
  func.func @transform_10(%arg0: i32) -> (i32, i32) {
    %c0_i32 = arith.constant 0 : i32
    %c0_i32_0 = arith.constant 0 : i32
    %c0_i32_1 = arith.constant 0 : i32
    return %c0_i32, %c0_i32_0 : i32, i32
  }
  func.func @transform_11(%arg0: i32) -> (i32, i32) {
    %c0_i32 = arith.constant 0 : i32
    %c0_i32_0 = arith.constant 0 : i32
    %c0_i32_1 = arith.constant 0 : i32
    return %c0_i32, %c0_i32_0 : i32, i32
  }
  func.func @transform_12(%arg0: i32) -> (i32, i32) {
    %c0_i32 = arith.constant 0 : i32
    %c0_i32_0 = arith.constant 0 : i32
    %c0_i32_1 = arith.constant 0 : i32
    return %c0_i32, %c0_i32_0 : i32, i32
  }
  func.func @transform_13(%arg0: i32) -> (i32, i32) {
    %c0_i32 = arith.constant 0 : i32
    %c0_i32_0 = arith.constant 0 : i32
    %c0_i32_1 = arith.constant 0 : i32
    return %c0_i32, %c0_i32_0 : i32, i32
  }
  func.func @transform_14(%arg0: i32) -> (i32, i32) {
    %c0_i32 = arith.constant 0 : i32
    %c0_i32_0 = arith.constant 0 : i32
    %c0_i32_1 = arith.constant 0 : i32
    return %c0_i32, %c0_i32_0 : i32, i32
  }
  func.func @transform_15(%arg0: i32) -> (i32, i32) {
    %c0_i32 = arith.constant 0 : i32
    %c0_i32_0 = arith.constant 0 : i32
    %c0_i32_1 = arith.constant 0 : i32
    return %c0_i32, %c0_i32_0 : i32, i32
  }
  func.func @transform_16(%arg0: i32) -> (i32, i32, i32) {
    %c0_i32 = arith.constant 0 : i32
    %c0_i32_0 = arith.constant 0 : i32
    %c0_i32_1 = arith.constant 0 : i32
    return %arg0, %c0_i32, %c0_i32_0 : i32, i32, i32
  }
}

</mosaic_0001>

<llo_original>
// kernel: convnet_forward.1
$region0: #{convnet_forward.1}
  #allocation0 [shape = 'u32[]', space=smem, size = 0x4, offset = 0x4, fixed_abs, tag = 'smem constant byte address 0x4 - core index']
  #allocation1 [shape = 'u32[144,128]{1,0:T(1,128)}', space=vmem, size = 0x12000, scoped, tag = 'internal scratch']
  %s0 = inlined_call_operand.vmem [shape: f32[2,64,32], index: 0, kind: input, shape index: {}]
  %s1 = inlined_call_operand.vmem [shape: f32[32,38], index: 1, kind: input, shape index: {}]
  %s2 = inlined_call_operand.vmem [shape: bf16[64,192], index: 2, kind: input, shape index: {}]
  %s3 = inlined_call_operand.vmem [shape: f32[64,1], index: 3, kind: input, shape index: {}]
  %s4 = inlined_call_operand.vmem [shape: f32[64,1], index: 4, kind: input, shape index: {}]
  %s5 = inlined_call_operand.vmem [shape: f32[64,1], index: 5, kind: input, shape index: {}]
  %s6 = inlined_call_operand.vmem [shape: f32[36,20], index: 6, kind: input, shape index: {}]
  %s7 = inlined_call_operand.vmem [shape: bf16[64,192], index: 7, kind: input, shape index: {}]
  %s8 = inlined_call_operand.vmem [shape: f32[64,1], index: 8, kind: input, shape index: {}]
  %s9 = inlined_call_operand.vmem [shape: f32[64,1], index: 9, kind: input, shape index: {}]
  %s10 = inlined_call_operand.vmem [shape: f32[64,1], index: 10, kind: input, shape index: {}]
  %s11 = inlined_call_operand.vmem [shape: f32[18,9], index: 11, kind: input, shape index: {}]
  %s12 = inlined_call_operand.vmem [shape: f32[9,640], index: 12, kind: input, shape index: {}]
  %s13 = inlined_call_operand.vmem [shape: f32[64,640], index: 13, kind: input, shape index: {}]
  %s14 = inlined_call_operand.vmem [shape: f32[640,10], index: 14, kind: input, shape index: {}]
  %s15 = inlined_call_operand.vmem [shape: f32[1,10], index: 15, kind: input, shape index: {}]
  %s16 = inlined_call_operand.hbm [shape: f32[2,1,10], index: 16, kind: output, shape index: {}]
  %s17 = sld [smem:[#allocation0]]
  $region97: #{convnet_forward.1} parent=0
    _
  %s19 = ssub.s32 1, %s17
  %s20 = scalar_select 0, %s19, %s17
  $region1: #{convnet_forward.1} parent=0
    #allocation2 [shape = 'u8[1024]{0}', space=vmem, size = 0x400, scoped, tag = 'output window, operand 0']
    #allocation3 [shape = 's32[2]{0}', space=sflag, size = 0x8, scoped, tag = 'scoped memory for convnet_forward.1']
    %21 = vsyncpa [#allocation3], 0
    %s22 = scalar_lea.sflag [#allocation3], 1
    %23 = vsyncpa %s22, 0
    loop: start=0, step=1, limit=4
    $region2: #{convnet_forward.1} parent=1 // loop_pre_header
      _
    $region3: #{convnet_forward.1} parent=1 // loop_header
      %s25 = sphi 0, %s29
      %p26 = scmp.ge.s32.totalorder %s25, 4
      %s35 = sphi 0, %s37
      %s38 = sphi 0, %s35
      %s39 = sphi 0, %s38
      %s55 = sphi 0, %s39
      %s59 = sphi 0, %s59
      %s61 = sphi 0, %s59
      %s62 = sphi 0, %s61
      %s76 = sphi 0, %s62
      %s80 = sphi 0, %s80
      %s82 = sphi 0, %s80
      %s83 = sphi 0, %s82
      %s97 = sphi 0, %s83
      %s101 = sphi 0, %s101
      %s103 = sphi 0, %s101
      %s104 = sphi 0, %s103
      %s118 = sphi 0, %s104
      %s122 = sphi 0, %s122
      %s124 = sphi 0, %s122
      %s125 = sphi 0, %s124
      %s139 = sphi 0, %s125
      %s143 = sphi 0, %s143
      %s145 = sphi 0, %s143
      %s146 = sphi 0, %s145
      %s160 = sphi 0, %s146
      %s164 = sphi 0, %s164
      %s166 = sphi 0, %s164
      %s167 = sphi 0, %s166
      %s181 = sphi 0, %s167
      %s185 = sphi 0, %s185
      %s187 = sphi 0, %s185
      %s188 = sphi 0, %s187
      %s202 = sphi 0, %s188
      %s206 = sphi 0, %s206
      %s208 = sphi 0, %s206
      %s209 = sphi 0, %s208
      %s223 = sphi 0, %s209
      %s227 = sphi 0, %s227
      %s229 = sphi 0, %s227
      %s230 = sphi 0, %s229
      %s244 = sphi 0, %s230
      %s248 = sphi 0, %s248
      %s250 = sphi 0, %s248
      %s251 = sphi 0, %s250
      %s265 = sphi 0, %s251
      %s269 = sphi 0, %s269
      %s271 = sphi 0, %s269
      %s272 = sphi 0, %s271
      %s286 = sphi 0, %s272
      %s290 = sphi 0, %s290
      %s292 = sphi 0, %s290
      %s293 = sphi 0, %s292
      %s307 = sphi 0, %s293
      %s311 = sphi 0, %s311
      %s313 = sphi 0, %s311
      %s314 = sphi 0, %s313
      %s328 = sphi 0, %s314
      %s332 = sphi 0, %s332
      %s334 = sphi 0, %s332
      %s335 = sphi 0, %s334
      %s349 = sphi 0, %s335
      %s353 = sphi 0, %s353
      %s355 = sphi 0, %s353
      %s356 = sphi 0, %s355
      %s370 = sphi 0, %s356
      %s376 = sphi 0, %s378
      %s379 = sphi 0, %s376
      %s380 = sphi 0, %s379
      %s396 = sphi 0, %s380
    $region4: #{convnet_forward.1} parent=1 // loop_header_branch
      %28 = sbr.rel (%p26) target = $region8
    $region5: #{convnet_forward.1} parent=1 // loop_body
      %s30 = ssub.s32 %s25, 1
      %s31 = ssub.s32 %s25, 2
      %s32 = sadd.s32 %s25, 1
      %s33 = ssub.s32 %s25, %s32
      %p34 = scmp.eq.s32.totalorder %s33, 0
      %s36 = sadd.s32 %s35, 1
      %s37 = scalar_select %p34, %s35, %s36
      %p40 = pneg %p34
      %p41 = scmp.eq.s32.totalorder %s25, 1
      %p42 = por %p40, %p41
      %p43 = scmp.ne.s32.totalorder %s35, %s38
      %p44 = scmp.eq.s32.totalorder %s25, 0
      %p45 = por %p43, %p44
      %p46 = scmp.ne.s32.totalorder %s35, %s38
      %p47 = scmp.eq.s32.totalorder %s30, 1
      %p48 = por %p46, %p47
      %p49 = scmp.ne.s32.totalorder %s38, %s39
      %p50 = scmp.eq.s32.totalorder %s30, 0
      %p51 = por %p49, %p50
      %p52 = scmp.ne.s32.totalorder %s38, %s39
      %p53 = scmp.eq.s32.totalorder %s31, 1
      %p54 = por %p52, %p53
      %p56 = scmp.ne.s32.totalorder %s39, %s55
      %p57 = scmp.eq.s32.totalorder %s31, 0
      %p58 = por %p56, %p57
      %s60 = sadd.s32 %s59, 1
      %p63 = scmp.eq.s32.totalorder %s25, 1
      %p64 = scmp.ne.s32.totalorder %s59, %s61
      %p65 = scmp.eq.s32.totalorder %s25, 0
      %p66 = por %p64, %p65
      %p67 = scmp.ne.s32.totalorder %s59, %s61
      %p68 = scmp.eq.s32.totalorder %s30, 1
      %p69 = por %p67, %p68
      %p70 = scmp.ne.s32.totalorder %s61, %s62
      %p71 = scmp.eq.s32.totalorder %s30, 0
      %p72 = por %p70, %p71
      %p73 = scmp.ne.s32.totalorder %s61, %s62
      %p74 = scmp.eq.s32.totalorder %s31, 1
      %p75 = por %p73, %p74
      %p77 = scmp.ne.s32.totalorder %s62, %s76
      %p78 = scmp.eq.s32.totalorder %s31, 0
      %p79 = por %p77, %p78
      %s81 = sadd.s32 %s80, 1
      %p84 = scmp.eq.s32.totalorder %s25, 1
      %p85 = scmp.ne.s32.totalorder %s80, %s82
      %p86 = scmp.eq.s32.totalorder %s25, 0
      %p87 = por %p85, %p86
      %p88 = scmp.ne.s32.totalorder %s80, %s82
      %p89 = scmp.eq.s32.totalorder %s30, 1
      %p90 = por %p88, %p89
      %p91 = scmp.ne.s32.totalorder %s82, %s83
      %p92 = scmp.eq.s32.totalorder %s30, 0
      %p93 = por %p91, %p92
      %p94 = scmp.ne.s32.totalorder %s82, %s83
      %p95 = scmp.eq.s32.totalorder %s31, 1
      %p96 = por %p94, %p95
      %p98 = scmp.ne.s32.totalorder %s83, %s97
      %p99 = scmp.eq.s32.totalorder %s31, 0
      %p100 = por %p98, %p99
      %s102 = sadd.s32 %s101, 1
      %p105 = scmp.eq.s32.totalorder %s25, 1
      %p106 = scmp.ne.s32.totalorder %s101, %s103
      %p107 = scmp.eq.s32.totalorder %s25, 0
      %p108 = por %p106, %p107
      %p109 = scmp.ne.s32.totalorder %s101, %s103
      %p110 = scmp.eq.s32.totalorder %s30, 1
      %p111 = por %p109, %p110
      %p112 = scmp.ne.s32.totalorder %s103, %s104
      %p113 = scmp.eq.s32.totalorder %s30, 0
      %p114 = por %p112, %p113
      %p115 = scmp.ne.s32.totalorder %s103, %s104
      %p116 = scmp.eq.s32.totalorder %s31, 1
      %p117 = por %p115, %p116
      %p119 = scmp.ne.s32.totalorder %s104, %s118
      %p120 = scmp.eq.s32.totalorder %s31, 0
      %p121 = por %p119, %p120
      %s123 = sadd.s32 %s122, 1
      %p126 = scmp.eq.s32.totalorder %s25, 1
      %p127 = scmp.ne.s32.totalorder %s122, %s124
      %p128 = scmp.eq.s32.totalorder %s25, 0
      %p129 = por %p127, %p128
      %p130 = scmp.ne.s32.totalorder %s122, %s124
      %p131 = scmp.eq.s32.totalorder %s30, 1
      %p132 = por %p130, %p131
      %p133 = scmp.ne.s32.totalorder %s124, %s125
      %p134 = scmp.eq.s32.totalorder %s30, 0
      %p135 = por %p133, %p134
      %p136 = scmp.ne.s32.totalorder %s124, %s125
      %p137 = scmp.eq.s32.totalorder %s31, 1
      %p138 = por %p136, %p137
      %p140 = scmp.ne.s32.totalorder %s125, %s139
      %p141 = scmp.eq.s32.totalorder %s31, 0
      %p142 = por %p140, %p141
      %s144 = sadd.s32 %s143, 1
      %p147 = scmp.eq.s32.totalorder %s25, 1
      %p148 = scmp.ne.s32.totalorder %s143, %s145
      %p149 = scmp.eq.s32.totalorder %s25, 0
      %p150 = por %p148, %p149
      %p151 = scmp.ne.s32.totalorder %s143, %s145
      %p152 = scmp.eq.s32.totalorder %s30, 1
      %p153 = por %p151, %p152
      %p154 = scmp.ne.s32.totalorder %s145, %s146
      %p155 = scmp.eq.s32.totalorder %s30, 0
      %p156 = por %p154, %p155
      %p157 = scmp.ne.s32.totalorder %s145, %s146
      %p158 = scmp.eq.s32.totalorder %s31, 1
      %p159 = por %p157, %p158
      %p161 = scmp.ne.s32.totalorder %s146, %s160
      %p162 = scmp.eq.s32.totalorder %s31, 0
      %p163 = por %p161, %p162
      %s165 = sadd.s32 %s164, 1
      %p168 = scmp.eq.s32.totalorder %s25, 1
      %p169 = scmp.ne.s32.totalorder %s164, %s166
      %p170 = scmp.eq.s32.totalorder %s25, 0
      %p171 = por %p169, %p170
      %p172 = scmp.ne.s32.totalorder %s164, %s166
      %p173 = scmp.eq.s32.totalorder %s30, 1
      %p174 = por %p172, %p173
      %p175 = scmp.ne.s32.totalorder %s166, %s167
      %p176 = scmp.eq.s32.totalorder %s30, 0
      %p177 = por %p175, %p176
      %p178 = scmp.ne.s32.totalorder %s166, %s167
      %p179 = scmp.eq.s32.totalorder %s31, 1
      %p180 = por %p178, %p179
      %p182 = scmp.ne.s32.totalorder %s167, %s181
      %p183 = scmp.eq.s32.totalorder %s31, 0
      %p184 = por %p182, %p183
      %s186 = sadd.s32 %s185, 1
      %p189 = scmp.eq.s32.totalorder %s25, 1
      %p190 = scmp.ne.s32.totalorder %s185, %s187
      %p191 = scmp.eq.s32.totalorder %s25, 0
      %p192 = por %p190, %p191
      %p193 = scmp.ne.s32.totalorder %s185, %s187
      %p194 = scmp.eq.s32.totalorder %s30, 1
      %p195 = por %p193, %p194
      %p196 = scmp.ne.s32.totalorder %s187, %s188
      %p197 = scmp.eq.s32.totalorder %s30, 0
      %p198 = por %p196, %p197
      %p199 = scmp.ne.s32.totalorder %s187, %s188
      %p200 = scmp.eq.s32.totalorder %s31, 1
      %p201 = por %p199, %p200
      %p203 = scmp.ne.s32.totalorder %s188, %s202
      %p204 = scmp.eq.s32.totalorder %s31, 0
      %p205 = por %p203, %p204
      %s207 = sadd.s32 %s206, 1
      %p210 = scmp.eq.s32.totalorder %s25, 1
      %p211 = scmp.ne.s32.totalorder %s206, %s208
      %p212 = scmp.eq.s32.totalorder %s25, 0
      %p213 = por %p211, %p212
      %p214 = scmp.ne.s32.totalorder %s206, %s208
      %p215 = scmp.eq.s32.totalorder %s30, 1
      %p216 = por %p214, %p215
      %p217 = scmp.ne.s32.totalorder %s208, %s209
      %p218 = scmp.eq.s32.totalorder %s30, 0
      %p219 = por %p217, %p218
      %p220 = scmp.ne.s32.totalorder %s208, %s209
      %p221 = scmp.eq.s32.totalorder %s31, 1
      %p222 = por %p220, %p221
      %p224 = scmp.ne.s32.totalorder %s209, %s223
      %p225 = scmp.eq.s32.totalorder %s31, 0
      %p226 = por %p224, %p225
      %s228 = sadd.s32 %s227, 1
      %p231 = scmp.eq.s32.totalorder %s25, 1
      %p232 = scmp.ne.s32.totalorder %s227, %s229
      %p233 = scmp.eq.s32.totalorder %s25, 0
      %p234 = por %p232, %p233
      %p235 = scmp.ne.s32.totalorder %s227, %s229
      %p236 = scmp.eq.s32.totalorder %s30, 1
      %p237 = por %p235, %p236
      %p238 = scmp.ne.s32.totalorder %s229, %s230
      %p239 = scmp.eq.s32.totalorder %s30, 0
      %p240 = por %p238, %p239
      %p241 = scmp.ne.s32.totalorder %s229, %s230
      %p242 = scmp.eq.s32.totalorder %s31, 1
      %p243 = por %p241, %p242
      %p245 = scmp.ne.s32.totalorder %s230, %s244
      %p246 = scmp.eq.s32.totalorder %s31, 0
      %p247 = por %p245, %p246
      %s249 = sadd.s32 %s248, 1
      %p252 = scmp.eq.s32.totalorder %s25, 1
      %p253 = scmp.ne.s32.totalorder %s248, %s250
      %p254 = scmp.eq.s32.totalorder %s25, 0
      %p255 = por %p253, %p254
      %p256 = scmp.ne.s32.totalorder %s248, %s250
      %p257 = scmp.eq.s32.totalorder %s30, 1
      %p258 = por %p256, %p257
      %p259 = scmp.ne.s32.totalorder %s250, %s251
      %p260 = scmp.eq.s32.totalorder %s30, 0
      %p261 = por %p259, %p260
      %p262 = scmp.ne.s32.totalorder %s250, %s251
      %p263 = scmp.eq.s32.totalorder %s31, 1
      %p264 = por %p262, %p263
      %p266 = scmp.ne.s32.totalorder %s251, %s265
      %p267 = scmp.eq.s32.totalorder %s31, 0
      %p268 = por %p266, %p267
      %s270 = sadd.s32 %s269, 1
      %p273 = scmp.eq.s32.totalorder %s25, 1
      %p274 = scmp.ne.s32.totalorder %s269, %s271
      %p275 = scmp.eq.s32.totalorder %s25, 0
      %p276 = por %p274, %p275
      %p277 = scmp.ne.s32.totalorder %s269, %s271
      %p278 = scmp.eq.s32.totalorder %s30, 1
      %p279 = por %p277, %p278
      %p280 = scmp.ne.s32.totalorder %s271, %s272
      %p281 = scmp.eq.s32.totalorder %s30, 0
      %p282 = por %p280, %p281
      %p283 = scmp.ne.s32.totalorder %s271, %s272
      %p284 = scmp.eq.s32.totalorder %s31, 1
      %p285 = por %p283, %p284
      %p287 = scmp.ne.s32.totalorder %s272, %s286
      %p288 = scmp.eq.s32.totalorder %s31, 0
      %p289 = por %p287, %p288
      %s291 = sadd.s32 %s290, 1
      %p294 = scmp.eq.s32.totalorder %s25, 1
      %p295 = scmp.ne.s32.totalorder %s290, %s292
      %p296 = scmp.eq.s32.totalorder %s25, 0
      %p297 = por %p295, %p296
      %p298 = scmp.ne.s32.totalorder %s290, %s292
      %p299 = scmp.eq.s32.totalorder %s30, 1
      %p300 = por %p298, %p299
      %p301 = scmp.ne.s32.totalorder %s292, %s293
      %p302 = scmp.eq.s32.totalorder %s30, 0
      %p303 = por %p301, %p302
      %p304 = scmp.ne.s32.totalorder %s292, %s293
      %p305 = scmp.eq.s32.totalorder %s31, 1
      %p306 = por %p304, %p305
      %p308 = scmp.ne.s32.totalorder %s293, %s307
      %p309 = scmp.eq.s32.totalorder %s31, 0
      %p310 = por %p308, %p309
      %s312 = sadd.s32 %s311, 1
      %p315 = scmp.eq.s32.totalorder %s25, 1
      %p316 = scmp.ne.s32.totalorder %s311, %s313
      %p317 = scmp.eq.s32.totalorder %s25, 0
      %p318 = por %p316, %p317
      %p319 = scmp.ne.s32.totalorder %s311, %s313
      %p320 = scmp.eq.s32.totalorder %s30, 1
      %p321 = por %p319, %p320
      %p322 = scmp.ne.s32.totalorder %s313, %s314
      %p323 = scmp.eq.s32.totalorder %s30, 0
      %p324 = por %p322, %p323
      %p325 = scmp.ne.s32.totalorder %s313, %s314
      %p326 = scmp.eq.s32.totalorder %s31, 1
      %p327 = por %p325, %p326
      %p329 = scmp.ne.s32.totalorder %s314, %s328
      %p330 = scmp.eq.s32.totalorder %s31, 0
      %p331 = por %p329, %p330
      %s333 = sadd.s32 %s332, 1
      %p336 = scmp.eq.s32.totalorder %s25, 1
      %p337 = scmp.ne.s32.totalorder %s332, %s334
      %p338 = scmp.eq.s32.totalorder %s25, 0
      %p339 = por %p337, %p338
      %p340 = scmp.ne.s32.totalorder %s332, %s334
      %p341 = scmp.eq.s32.totalorder %s30, 1
      %p342 = por %p340, %p341
      %p343 = scmp.ne.s32.totalorder %s334, %s335
      %p344 = scmp.eq.s32.totalorder %s30, 0
      %p345 = por %p343, %p344
      %p346 = scmp.ne.s32.totalorder %s334, %s335
      %p347 = scmp.eq.s32.totalorder %s31, 1
      %p348 = por %p346, %p347
      %p350 = scmp.ne.s32.totalorder %s335, %s349
      %p351 = scmp.eq.s32.totalorder %s31, 0
      %p352 = por %p350, %p351
      %s354 = sadd.s32 %s353, 1
      %p357 = scmp.eq.s32.totalorder %s25, 1
      %p358 = scmp.ne.s32.totalorder %s353, %s355
      %p359 = scmp.eq.s32.totalorder %s25, 0
      %p360 = por %p358, %p359
      %p361 = scmp.ne.s32.totalorder %s353, %s355
      %p362 = scmp.eq.s32.totalorder %s30, 1
      %p363 = por %p361, %p362
      %p364 = scmp.ne.s32.totalorder %s355, %s356
      %p365 = scmp.eq.s32.totalorder %s30, 0
      %p366 = por %p364, %p365
      %p367 = scmp.ne.s32.totalorder %s355, %s356
      %p368 = scmp.eq.s32.totalorder %s31, 1
      %p369 = por %p367, %p368
      %p371 = scmp.ne.s32.totalorder %s356, %s370
      %p372 = scmp.eq.s32.totalorder %s31, 0
      %p373 = por %p371, %p372
      %s374 = ssub.s32 %s25, %s32
      %p375 = scmp.eq.s32.totalorder %s374, 0
      %s377 = sadd.s32 %s376, 1
      %s378 = scalar_select %p375, %s376, %s377
      %p381 = pneg %p375
      %p382 = scmp.eq.s32.totalorder %s25, 1
      %p383 = por %p381, %p382
      %p384 = scmp.ne.s32.totalorder %s376, %s379
      %p385 = scmp.eq.s32.totalorder %s25, 0
      %p386 = por %p384, %p385
      %p387 = scmp.ne.s32.totalorder %s376, %s379
      %p388 = scmp.eq.s32.totalorder %s30, 1
      %p389 = por %p387, %p388
      %p390 = scmp.ne.s32.totalorder %s379, %s380
      %p391 = scmp.eq.s32.totalorder %s30, 0
      %p392 = por %p390, %p391
      %p393 = scmp.ne.s32.totalorder %s379, %s380
      %p394 = scmp.eq.s32.totalorder %s31, 1
      %p395 = por %p393, %p394
      %p397 = scmp.ne.s32.totalorder %s380, %s396
      %p398 = scmp.eq.s32.totalorder %s31, 0
      %p399 = por %p397, %p398
      %p400 = scmp.le.s32.totalorder 1, %s25
      %p401 = scmp.lt.s32.totalorder %s25, 3
      %p402 = pnand %p400, %p401
      %p403 = pneg %p402
      // Predicated region
      $region9: #{convnet_forward.1} parent=5 // pred_check
        _
      $region10: #{convnet_forward.1} parent=5 // pred_check_branch
        %405 = sbr.rel (%p402) target = $region12
      $region11: #{convnet_forward.1} parent=5 // pred_region
        %s406 = ssub.s32 %s25, 1
        // Predicated region
        $region13: #{convnet_forward.1} parent=11 // pred_check
          %p407 = pneg %p72
        $region14: #{convnet_forward.1} parent=11 // pred_check_branch
          %409 = sbr.rel (%p407) target = $region16
        $region15: #{convnet_forward.1} parent=11 // pred_region
          _
        $region16: #{convnet_forward.1} parent=11 // pred_fallthru
          _
        // Predicated region
        $region17: #{convnet_forward.1} parent=11 // pred_check
          %p410 = pneg %p93
        $region18: #{convnet_forward.1} parent=11 // pred_check_branch
          %412 = sbr.rel (%p410) target = $region20
        $region19: #{convnet_forward.1} parent=11 // pred_region
          _
        $region20: #{convnet_forward.1} parent=11 // pred_fallthru
          _
        // Predicated region
        $region21: #{convnet_forward.1} parent=11 // pred_check
          %p413 = pneg %p114
        $region22: #{convnet_forward.1} parent=11 // pred_check_branch
          %415 = sbr.rel (%p413) target = $region24
        $region23: #{convnet_forward.1} parent=11 // pred_region
          _
        $region24: #{convnet_forward.1} parent=11 // pred_fallthru
          _
        // Predicated region
        $region25: #{convnet_forward.1} parent=11 // pred_check
          %p416 = pneg %p135
        $region26: #{convnet_forward.1} parent=11 // pred_check_branch
          %418 = sbr.rel (%p416) target = $region28
        $region27: #{convnet_forward.1} parent=11 // pred_region
          _
        $region28: #{convnet_forward.1} parent=11 // pred_fallthru
          _
        // Predicated region
        $region29: #{convnet_forward.1} parent=11 // pred_check
          %p419 = pneg %p156
        $region30: #{convnet_forward.1} parent=11 // pred_check_branch
          %421 = sbr.rel (%p419) target = $region32
        $region31: #{convnet_forward.1} parent=11 // pred_region
          _
        $region32: #{convnet_forward.1} parent=11 // pred_fallthru
          _
        // Predicated region
        $region33: #{convnet_forward.1} parent=11 // pred_check
          %p422 = pneg %p177
        $region34: #{convnet_forward.1} parent=11 // pred_check_branch
          %424 = sbr.rel (%p422) target = $region36
        $region35: #{convnet_forward.1} parent=11 // pred_region
          _
        $region36: #{convnet_forward.1} parent=11 // pred_fallthru
          _
        // Predicated region
        $region37: #{convnet_forward.1} parent=11 // pred_check
          %p425 = pneg %p198
        $region38: #{convnet_forward.1} parent=11 // pred_check_branch
          %427 = sbr.rel (%p425) target = $region40
        $region39: #{convnet_forward.1} parent=11 // pred_region
          _
        $region40: #{convnet_forward.1} parent=11 // pred_fallthru
          _
        // Predicated region
        $region41: #{convnet_forward.1} parent=11 // pred_check
          %p428 = pneg %p219
        $region42: #{convnet_forward.1} parent=11 // pred_check_branch
          %430 = sbr.rel (%p428) target = $region44
        $region43: #{convnet_forward.1} parent=11 // pred_region
          _
        $region44: #{convnet_forward.1} parent=11 // pred_fallthru
          _
        // Predicated region
        $region45: #{convnet_forward.1} parent=11 // pred_check
          %p431 = pneg %p240
        $region46: #{convnet_forward.1} parent=11 // pred_check_branch
          %433 = sbr.rel (%p431) target = $region48
        $region47: #{convnet_forward.1} parent=11 // pred_region
          _
        $region48: #{convnet_forward.1} parent=11 // pred_fallthru
          _
        // Predicated region
        $region49: #{convnet_forward.1} parent=11 // pred_check
          %p434 = pneg %p261
        $region50: #{convnet_forward.1} parent=11 // pred_check_branch
          %436 = sbr.rel (%p434) target = $region52
        $region51: #{convnet_forward.1} parent=11 // pred_region
          _
        $region52: #{convnet_forward.1} parent=11 // pred_fallthru
          _
        // Predicated region
        $region53: #{convnet_forward.1} parent=11 // pred_check
          %p437 = pneg %p282
        $region54: #{convnet_forward.1} parent=11 // pred_check_branch
          %439 = sbr.rel (%p437) target = $region56
        $region55: #{convnet_forward.1} parent=11 // pred_region
          _
        $region56: #{convnet_forward.1} parent=11 // pred_fallthru
          _
        // Predicated region
        $region57: #{convnet_forward.1} parent=11 // pred_check
          %p440 = pneg %p303
        $region58: #{convnet_forward.1} parent=11 // pred_check_branch
          %442 = sbr.rel (%p440) target = $region60
        $region59: #{convnet_forward.1} parent=11 // pred_region
          _
        $region60: #{convnet_forward.1} parent=11 // pred_fallthru
          _
        // Predicated region
        $region61: #{convnet_forward.1} parent=11 // pred_check
          %p443 = pneg %p324
        $region62: #{convnet_forward.1} parent=11 // pred_check_branch
          %445 = sbr.rel (%p443) target = $region64
        $region63: #{convnet_forward.1} parent=11 // pred_region
          _
        $region64: #{convnet_forward.1} parent=11 // pred_fallthru
          _
        // Predicated region
        $region65: #{convnet_forward.1} parent=11 // pred_check
          %p446 = pneg %p345
        $region66: #{convnet_forward.1} parent=11 // pred_check_branch
          %448 = sbr.rel (%p446) target = $region68
        $region67: #{convnet_forward.1} parent=11 // pred_region
          _
        $region68: #{convnet_forward.1} parent=11 // pred_fallthru
          _
        // Predicated region
        $region69: #{convnet_forward.1} parent=11 // pred_check
          %p449 = pneg %p366
        $region70: #{convnet_forward.1} parent=11 // pred_check_branch
          %451 = sbr.rel (%p449) target = $region72
        $region71: #{convnet_forward.1} parent=11 // pred_region
          _
        $region72: #{convnet_forward.1} parent=11 // pred_fallthru
          _
      $region12: #{convnet_forward.1} parent=5 // pred_fallthru
        _
      %p452 = scmp.lt.s32.totalorder %s25, 2
      // Predicated region
      $region73: #{convnet_forward.1} parent=5 // pred_check
        %p453 = pneg %p452
      $region74: #{convnet_forward.1} parent=5 // pred_check_branch
        %455 = sbr.rel (%p453) target = $region76
      $region75: #{convnet_forward.1} parent=5 // pred_region
        // Predicated region
        $region77: #{convnet_forward.1} parent=75 // pred_check
          %p456 = pneg %p45
        $region78: #{convnet_forward.1} parent=75 // pred_check_branch
          %458 = sbr.rel (%p456) target = $region80
        $region79: #{convnet_forward.1} parent=75 // pred_region
          %p459 = scmp.lt.s32.totalorder %s25, 1
          %s460 = scalar_select %p459, %s25, 1
          %s461 = smul.addr %s460, 8
          %s462 = smul.addr %s461, 8
          %s463 = scalar_lea.vmem %s0, %s462
        $region80: #{convnet_forward.1} parent=75 // pred_fallthru
          _
      $region76: #{convnet_forward.1} parent=5 // pred_fallthru
        _
      %p464 = scmp.le.s32.totalorder 1, %s25
      %p465 = scmp.lt.s32.totalorder %s25, 3
      %p466 = pnand %p464, %p465
      %p467 = pneg %p466
      // Predicated region
      $region81: #{convnet_forward.1} parent=5 // pred_check
        _
      $region82: #{convnet_forward.1} parent=5 // pred_check_branch
        %469 = sbr.rel (%p466) target = $region84
      $region83: #{convnet_forward.1} parent=5 // pred_region
        %s470 = ssub.s32 %s25, 1
        %p471 = scmp.lt.s32.totalorder %s30, 1
        %s472 = scalar_select %p471, %s30, 1
        %s473 = smul.addr %s472, 8
        %s474 = smul.addr %s473, 8
        %s475 = scalar_lea.vmem %s0, %s474
        %p476 = pneg %p51
        %p477 = pneg %p48
        %p478 = pneg %p72
        %p479 = pneg %p69
        %p480 = pneg %p93
        %p481 = pneg %p90
        %p482 = pneg %p114
        %p483 = pneg %p111
        %p484 = pneg %p135
        %p485 = pneg %p132
        %p486 = pneg %p156
        %p487 = pneg %p153
        %p488 = pneg %p177
        %p489 = pneg %p174
        %p490 = pneg %p198
        %p491 = pneg %p195
        %p492 = pneg %p219
        %p493 = pneg %p216
        %p494 = pneg %p240
        %p495 = pneg %p237
        %p496 = pneg %p261
        %p497 = pneg %p258
        %p498 = pneg %p282
        %p499 = pneg %p279
        %p500 = pneg %p303
        %p501 = pneg %p300
        %p502 = pneg %p324
        %p503 = pneg %p321
        %p504 = pneg %p345
        %p505 = pneg %p342
        %p506 = pneg %p366
        %p507 = pneg %p363
        %p508 = pneg %p392
        %p509 = pneg %p389
        %s510 = sand.u32 %s379, 1
        %s511 = scalar_lea.sflag [#allocation3], %s510
        %s512 = sand.u32 %s379, 1
        %s513 = scalar_lea.vmem [#allocation2], %s512
        %p514 = scmp.lt.s32.totalorder %s30, 1
        %s515 = scalar_select %p514, %s30, 1
        %s516 = smul.addr %s515, 8
        %s517 = smul.addr %s516, 8
        %s518 = scalar_lea.vmem %s0, %s517
        %v520 = vld [vmem:[%s518] sm:$0xff]
        %v521 = vld [vmem:[%s518 + $0x8] sm:$0xff]
        %v522 = vld [vmem:[%s518 + $0x10] sm:$0xff]
        %v523 = vld [vmem:[%s518 + $0x18] sm:$0xff]
        %v524 = vld [vmem:[%s518 + $0x20] sm:$0xff]
        %v525 = vld [vmem:[%s518 + $0x28] sm:$0xff]
        %v526 = vld [vmem:[%s518 + $0x30] sm:$0xff]
        %v527 = vld [vmem:[%s518 + $0x38] sm:$0xff]
        %v528 = vld [vmem:[%s1] sm:$0xff]
        %v529 = vld [vmem:[%s1 + $0x8] sm:$0xff]
        %v530 = vld [vmem:[%s1 + $0x10] sm:$0xff]
        %v531 = vld [vmem:[%s1 + $0x18] sm:$0xff]
        %vm532 = vcmask 261120
        %v534 = vsel %vm532, %v520, 0
        %v537 = vsel %vm532, %v521, 0
        %v540 = vsel %vm532, %v522, 0
        %v543 = vsel %vm532, %v523, 0
        %v546 = vsel %vm532, %v524, 0
        %v549 = vsel %vm532, %v525, 0
        %v552 = vsel %vm532, %v526, 0
        %v555 = vsel %vm532, %v527, 0
        %557 = vmatprep.subr.mxu0 0.0
        %558 = vmatpush1.msra.mxu0 %v528
        %559 = vmatprep.subr.mxu0 0.0
        %560 = vmatpush1.msra.mxu0 %v529
        %561 = vmatprep.subr.mxu0 0.0
        %562 = vmatpush1.msra.mxu0 %v530
        %563 = vmatprep.subr.mxu0 0.0
        %564 = vmatpush1.msra.mxu0 %v531
        %565 = vmatprep.subr.mxu0 0.0
        %566 = vmatpush1.msra.mxu0 0.0
        %567 = vmatprep.subr.mxu0 0.0
        %568 = vmatpush1.msra.mxu0 0.0
        %569 = vmatprep.subr.mxu0 0.0
        %570 = vmatpush1.msra.mxu0 0.0
        %571 = vmatprep.subr.mxu0 0.0
        %572 = vmatpush1.msra.mxu0 0.0
        %573 = vmatprep.subr.mxu0 0.0
        %574 = vmatpush1.msra.mxu0 0.0
        %575 = vmatprep.subr.mxu0 0.0
        %576 = vmatpush1.msra.mxu0 0.0
        %577 = vmatprep.subr.mxu0 0.0
        %578 = vmatpush1.msra.mxu0 0.0
        %579 = vmatprep.subr.mxu0 0.0
        %580 = vmatpush1.msra.mxu0 0.0
        %581 = vmatprep.subr.mxu0 0.0
        %582 = vmatpush1.msra.mxu0 0.0
        %583 = vmatprep.subr.mxu0 0.0
        %584 = vmatpush1.msra.mxu0 0.0
        %585 = vmatprep.subr.mxu0 0.0
        %586 = vmatpush1.msra.mxu0 0.0
        %587 = vmatprep.subr.mxu0 0.0
        %588 = vmatpush1.msra.mxu0 0.0
        %589 = vmatprep.subr.mxu0 0.0
        %590 = vmatpush1.msra.mxu0 0.0
        %591 = vmatprep.subr.mxu0 0.0
        %592 = vmatpush1.msra.mxu0 0.0
        %593 = vmatprep.subr.mxu0 0.0
        %594 = vmatpush1.msra.mxu0 0.0
        %595 = vmatprep.subr.mxu0 0.0
        %596 = vmatpush1.msra.mxu0 0.0
        %597 = vmatprep.subr.mxu0 0.0
        %598 = vmatpush1.msra.mxu0 0.0
        %599 = vmatprep.subr.mxu0 0.0
        %600 = vmatpush1.msra.mxu0 0.0
        %601 = vmatprep.subr.mxu0 0.0
        %602 = vmatpush1.msra.mxu0 0.0
        %603 = vmatprep.subr.mxu0 0.0
        %604 = vmatpush1.msra.mxu0 0.0
        %605 = vmatprep.subr.mxu0 0.0
        %606 = vmatpush1.msra.mxu0 0.0
        %607 = vmatprep.subr.mxu0 0.0
        %608 = vmatpush1.msra.mxu0 0.0
        %609 = vmatprep.subr.mxu0 0.0
        %610 = vmatpush1.msra.mxu0 0.0
        %611 = vmatprep.subr.mxu0 0.0
        %612 = vmatpush1.msra.mxu0 0.0
        %613 = vmatprep.subr.mxu0 0.0
        %614 = vmatpush1.msra.mxu0 0.0
        %615 = vmatprep.subr.mxu0 0.0
        %616 = vmatpush1.msra.mxu0 0.0
        %617 = vmatprep.subr.mxu0 0.0
        %618 = vmatpush1.msra.mxu0 0.0
        %619 = vmatprep.subr.mxu0 0.0
        %620 = vmatpush1.msra.mxu0 0.0
        %621 = vmatprep.mubr.f32.mxu0 0.0
        %622 = vmatmul.mubr.f32.gmra.mrb[0].mxu0 %v534
        %v623 = vpop.f32.mrb[0].mxu0
        %v624 = vadd.f32 0.0, %v623
        %v625 = vpop.f32.mrb[0].mxu0
        %626 = vmatprep.mubr.f32.mxu0 0.0
        %627 = vmatmul.mubr.f32.gmra.mrb[0].mxu0 %v537
        %v628 = vpop.f32.mrb[0].mxu0
        %v629 = vadd.f32 0.0, %v628
        %v630 = vpop.f32.mrb[0].mxu0
        %631 = vmatprep.mubr.f32.mxu0 0.0
        %632 = vmatmul.mubr.f32.gmra.mrb[0].mxu0 %v540
        %v633 = vpop.f32.mrb[0].mxu0
        %v634 = vadd.f32 0.0, %v633
        %v635 = vpop.f32.mrb[0].mxu0
        %636 = vmatprep.mubr.f32.mxu0 0.0
        %637 = vmatmul.mubr.f32.gmra.mrb[0].mxu0 %v543
        %v638 = vpop.f32.mrb[0].mxu0
        %v639 = vadd.f32 0.0, %v638
        %v640 = vpop.f32.mrb[0].mxu0
        %641 = vmatprep.mubr.f32.mxu0 0.0
        %642 = vmatmul.mubr.f32.gmra.mrb[0].mxu0 %v546
        %v643 = vpop.f32.mrb[0].mxu0
        %v644 = vadd.f32 0.0, %v643
        %v645 = vpop.f32.mrb[0].mxu0
        %646 = vmatprep.mubr.f32.mxu0 0.0
        %647 = vmatmul.mubr.f32.gmra.mrb[0].mxu0 %v549
        %v648 = vpop.f32.mrb[0].mxu0
        %v649 = vadd.f32 0.0, %v648
        %v650 = vpop.f32.mrb[0].mxu0
        %651 = vmatprep.mubr.f32.mxu0 0.0
        %652 = vmatmul.mubr.f32.gmra.mrb[0].mxu0 %v552
        %v653 = vpop.f32.mrb[0].mxu0
        %v654 = vadd.f32 0.0, %v653
        %v655 = vpop.f32.mrb[0].mxu0
        %656 = vmatprep.mubr.f32.mxu0 0.0
        %657 = vmatmul.mubr.f32.gmra.mrb[0].mxu0 %v555
        %v658 = vpop.f32.mrb[0].mxu0
        %v659 = vadd.f32 0.0, %v658
        %v660 = vpop.f32.mrb[0].mxu0
        %661 = vdwg.mxu0
        %670 = vrot.lane.b32.xlu0 %v624, 127
        %v671 = vpop.permute.xlu0 %670
        %672 = vrot.lane.b32.xlu0 %v629, 127
        %v673 = vpop.permute.xlu0 %672
        %674 = vrot.lane.b32.xlu0 %v634, 127
        %v675 = vpop.permute.xlu0 %674
        %676 = vrot.lane.b32.xlu0 %v639, 127
        %v677 = vpop.permute.xlu0 %676
        %678 = vrot.lane.b32.xlu0 %v644, 127
        %v679 = vpop.permute.xlu0 %678
        %680 = vrot.lane.b32.xlu0 %v649, 127
        %v681 = vpop.permute.xlu0 %680
        %682 = vrot.lane.b32.xlu0 %v654, 127
        %v683 = vpop.permute.xlu0 %682
        %684 = vrot.lane.b32.xlu0 %v659, 127
        %v685 = vpop.permute.xlu0 %684
        %694 = vrot.lane.b32.xlu0 %v624, 126
        %v695 = vpop.permute.xlu0 %694
        %696 = vrot.lane.b32.xlu0 %v629, 126
        %v697 = vpop.permute.xlu0 %696
        %698 = vrot.lane.b32.xlu0 %v634, 126
        %v699 = vpop.permute.xlu0 %698
        %700 = vrot.lane.b32.xlu0 %v639, 126
        %v701 = vpop.permute.xlu0 %700
        %702 = vrot.lane.b32.xlu0 %v644, 126
        %v703 = vpop.permute.xlu0 %702
        %704 = vrot.lane.b32.xlu0 %v649, 126
        %v705 = vpop.permute.xlu0 %704
        %706 = vrot.lane.b32.xlu0 %v654, 126
        %v707 = vpop.permute.xlu0 %706
        %708 = vrot.lane.b32.xlu0 %v659, 126
        %v709 = vpop.permute.xlu0 %708
        %v718 = vld [vmem:[%s2] sm:$0xff]
        %v719 = vld [vmem:[%s2 + $0x8] sm:$0xff]
        %v720 = vld [vmem:[%s2 + $0x10] sm:$0xff]
        %v721 = vld [vmem:[%s2 + $0x18] sm:$0xff]
        %v722 = vld [vmem:[%s2 + $0x20] sm:$0xff]
        %v723 = vld [vmem:[%s2 + $0x28] sm:$0xff]
        %v724 = vld [vmem:[%s2 + $0x30] sm:$0xff]
        %v725 = vld [vmem:[%s2 + $0x38] sm:$0xff]
        %v726 = vpack.c.bf16 %v629, %v624
        %v727 = vpack.c.bf16 %v639, %v634
        %v728 = vpack.c.bf16 %v649, %v644
        %v729 = vpack.c.bf16 %v659, %v654
        %v730 = vpack.c.bf16 %v673, %v671
        %v731 = vpack.c.bf16 %v677, %v675
        %v732 = vpack.c.bf16 %v681, %v679
        %v733 = vpack.c.bf16 %v685, %v683
        %v734 = vpack.c.bf16 %v697, %v695
        %v735 = vpack.c.bf16 %v701, %v699
        %v736 = vpack.c.bf16 %v705, %v703
        %v737 = vpack.c.bf16 %v709, %v707
        %v738 = vld [vmem:[%s3] sm:$0xff]
        %v739 = vld [vmem:[%s3 + $0x8] sm:$0xff]
        %v740 = vld [vmem:[%s3 + $0x10] sm:$0xff]
        %v741 = vld [vmem:[%s3 + $0x18] sm:$0xff]
        %v742 = vld [vmem:[%s3 + $0x20] sm:$0xff]
        %v743 = vld [vmem:[%s3 + $0x28] sm:$0xff]
        %v744 = vld [vmem:[%s3 + $0x30] sm:$0xff]
        %v745 = vld [vmem:[%s3 + $0x38] sm:$0xff]
        %747 = vset.pattern.permute.xlu0 0
        %748 = vperm.xlu0 %747, %v738
        %v749 = vpop.permute.xlu0 %748
        %752 = vset.pattern.permute.xlu0 0
        %753 = vperm.xlu0 %752, %v739
        %v754 = vpop.permute.xlu0 %753
        %757 = vset.pattern.permute.xlu0 0
        %758 = vperm.xlu0 %757, %v740
        %v759 = vpop.permute.xlu0 %758
        %762 = vset.pattern.permute.xlu0 0
        %763 = vperm.xlu0 %762, %v741
        %v764 = vpop.permute.xlu0 %763
        %767 = vset.pattern.permute.xlu0 0
        %768 = vperm.xlu0 %767, %v742
        %v769 = vpop.permute.xlu0 %768
        %772 = vset.pattern.permute.xlu0 0
        %773 = vperm.xlu0 %772, %v743
        %v774 = vpop.permute.xlu0 %773
        %777 = vset.pattern.permute.xlu0 0
        %778 = vperm.xlu0 %777, %v744
        %v779 = vpop.permute.xlu0 %778
        %782 = vset.pattern.permute.xlu0 0
        %783 = vperm.xlu0 %782, %v745
        %v784 = vpop.permute.xlu0 %783
        %v794 = vunpack.c.l.b16 %v718
        %v795 = vunpack.c.h.b16 %v718
        %v796 = vunpack.c.l.b16 %v719
        %v797 = vunpack.c.h.b16 %v719
        %v798 = vunpack.c.l.b16 %v720
        %v799 = vunpack.c.h.b16 %v720
        %v800 = vunpack.c.l.b16 %v721
        %v801 = vunpack.c.h.b16 %v721
        %v802 = vunpack.c.l.b16 %v722
        %v803 = vunpack.c.h.b16 %v722
        %v804 = vunpack.c.l.b16 %v723
        %v805 = vunpack.c.h.b16 %v723
        %v806 = vunpack.c.l.b16 %v724
        %v807 = vunpack.c.h.b16 %v724
        %v808 = vunpack.c.l.b16 %v725
        %v809 = vunpack.c.h.b16 %v725
        %v810 = vpack.c.b16 %v796, %v794
        %v811 = vpack.c.b16 %v797, %v795
        %v812 = vpack.c.b16 %v800, %v798
        %v813 = vpack.c.b16 %v801, %v799
        %v814 = vpack.c.b16 %v804, %v802
        %v815 = vpack.c.b16 %v805, %v803
        %v816 = vpack.c.b16 %v808, %v806
        %v817 = vpack.c.b16 %v809, %v807
        %vm822 = vcmask 523264
        %v824 = vsel %vm822, %v811, 0
        %v827 = vsel %vm822, %v813, 0
        %v830 = vsel %vm822, %v815, 0
        %v833 = vsel %vm822, %v817, 0
        %835 = vmatprep.subr.bf16.mxu0 0
        %836 = vmatpush1.bf16.msra.mxu0 %v726
        %837 = vmatprep.subr.bf16.mxu0 0
        %838 = vmatpush1.bf16.msra.mxu0 %v727
        %839 = vmatprep.subr.bf16.mxu0 0
        %840 = vmatpush1.bf16.msra.mxu0 %v728
        %841 = vmatprep.subr.bf16.mxu0 0
        %842 = vmatpush1.bf16.msra.mxu0 %v729
        %843 = vmatprep.subr.bf16.mxu0 0
        %844 = vmatpush1.bf16.msra.mxu0 %v730
        %845 = vmatprep.subr.bf16.mxu0 0
        %846 = vmatpush1.bf16.msra.mxu0 %v731
        %847 = vmatprep.subr.bf16.mxu0 0
        %848 = vmatpush1.bf16.msra.mxu0 %v732
        %849 = vmatprep.subr.bf16.mxu0 0
        %850 = vmatpush1.bf16.msra.mxu0 %v733
        %851 = vmatprep.subr.bf16.mxu0 0
        %852 = vmatpush1.bf16.msra.mxu0 %v734
        %853 = vmatprep.subr.bf16.mxu0 0
        %854 = vmatpush1.bf16.msra.mxu0 %v735
        %855 = vmatprep.subr.bf16.mxu0 0
        %856 = vmatpush1.bf16.msra.mxu0 %v736
        %857 = vmatprep.subr.bf16.mxu0 0
        %858 = vmatpush1.bf16.msra.mxu0 %v737
        %859 = vmatprep.subr.bf16.mxu0 0
        %860 = vmatpush1.bf16.msra.mxu0 0
        %861 = vmatprep.subr.bf16.mxu0 0
        %862 = vmatpush1.bf16.msra.mxu0 0
        %863 = vmatprep.subr.bf16.mxu0 0
        %864 = vmatpush1.bf16.msra.mxu0 0
        %865 = vmatprep.subr.bf16.mxu0 0
        %866 = vmatpush1.bf16.msra.mxu0 0
        %867 = vmatprep.mubr.bf16.mxu0 %v824
        %868 = vmatmul.mubr.bf16.gmra.mrb[0].mxu0 %v810
        %v869 = vpop.f32.mrb[0].mxu0
        %v870 = vadd.f32 %v749, %v869
        %v871 = vpop.f32.mrb[0].mxu0
        %v872 = vpop.f32.mrb[0].mxu0
        %v873 = vadd.f32 %v754, %v872
        %v874 = vpop.f32.mrb[0].mxu0
        %875 = vmatprep.mubr.bf16.mxu0 %v827
        %876 = vmatmul.mubr.bf16.gmra.mrb[0].mxu0 %v812
        %v877 = vpop.f32.mrb[0].mxu0
        %v878 = vadd.f32 %v759, %v877
        %v879 = vpop.f32.mrb[0].mxu0
        %v880 = vpop.f32.mrb[0].mxu0
        %v881 = vadd.f32 %v764, %v880
        %v882 = vpop.f32.mrb[0].mxu0
        %883 = vmatprep.mubr.bf16.mxu0 %v830
        %884 = vmatmul.mubr.bf16.gmra.mrb[0].mxu0 %v814
        %v885 = vpop.f32.mrb[0].mxu0
        %v886 = vadd.f32 %v769, %v885
        %v887 = vpop.f32.mrb[0].mxu0
        %v888 = vpop.f32.mrb[0].mxu0
        %v889 = vadd.f32 %v774, %v888
        %v890 = vpop.f32.mrb[0].mxu0
        %891 = vmatprep.mubr.bf16.mxu0 %v833
        %892 = vmatmul.mubr.bf16.gmra.mrb[0].mxu0 %v816
        %v893 = vpop.f32.mrb[0].mxu0
        %v894 = vadd.f32 %v779, %v893
        %v895 = vpop.f32.mrb[0].mxu0
        %v896 = vpop.f32.mrb[0].mxu0
        %v897 = vadd.f32 %v784, %v896
        %v898 = vpop.f32.mrb[0].mxu0
        %899 = vdwg.mxu0
        %vm900 = vcmask 293888
        %v901 = vsel %vm900, %v870, 0.0
        %902 = vadd.xlane.f32.xlu0 %v901
        %v903 = vpop.xlane.xlu0 %902
        %v904 = vsel %vm900, %v873, 0.0
        %905 = vadd.xlane.f32.xlu0 %v904
        %v906 = vpop.xlane.xlu0 %905
        %v907 = vsel %vm900, %v878, 0.0
        %908 = vadd.xlane.f32.xlu0 %v907
        %v909 = vpop.xlane.xlu0 %908
        %v910 = vsel %vm900, %v881, 0.0
        %911 = vadd.xlane.f32.xlu0 %v910
        %v912 = vpop.xlane.xlu0 %911
        %v913 = vsel %vm900, %v886, 0.0
        %914 = vadd.xlane.f32.xlu0 %v913
        %v915 = vpop.xlane.xlu0 %914
        %v916 = vsel %vm900, %v889, 0.0
        %917 = vadd.xlane.f32.xlu0 %v916
        %v918 = vpop.xlane.xlu0 %917
        %v919 = vsel %vm900, %v894, 0.0
        %920 = vadd.xlane.f32.xlu0 %v919
        %v921 = vpop.xlane.xlu0 %920
        %v922 = vsel %vm900, %v897, 0.0
        %923 = vadd.xlane.f32.xlu0 %v922
        %v924 = vpop.xlane.xlu0 %923
        %v925 = vrcp.pop 36.0
        %v926 = vmul.f32 %v903, %v925
        %v927 = vmul.f32 %v906, %v925
        %v928 = vmul.f32 %v909, %v925
        %v929 = vmul.f32 %v912, %v925
        %v930 = vmul.f32 %v915, %v925
        %v931 = vmul.f32 %v918, %v925
        %v932 = vmul.f32 %v921, %v925
        %v933 = vmul.f32 %v924, %v925
        %v934 = vsub.f32 %v870, %v926
        %v935 = vsub.f32 %v873, %v927
        %v936 = vsub.f32 %v878, %v928
        %v937 = vsub.f32 %v881, %v929
        %v938 = vsub.f32 %v886, %v930
        %v939 = vsub.f32 %v889, %v931
        %v940 = vsub.f32 %v894, %v932
        %v941 = vsub.f32 %v897, %v933
        %v942 = vmul.f32 %v934, %v934
        %v943 = vmul.f32 %v935, %v935
        %v944 = vmul.f32 %v936, %v936
        %v945 = vmul.f32 %v937, %v937
        %v946 = vmul.f32 %v938, %v938
        %v947 = vmul.f32 %v939, %v939
        %v948 = vmul.f32 %v940, %v940
        %v949 = vmul.f32 %v941, %v941
        %v950 = vsel %vm900, %v942, 0.0
        %951 = vadd.xlane.f32.xlu0 %v950
        %v952 = vpop.xlane.xlu0 %951
        %v953 = vsel %vm900, %v943, 0.0
        %954 = vadd.xlane.f32.xlu0 %v953
        %v955 = vpop.xlane.xlu0 %954
        %v956 = vsel %vm900, %v944, 0.0
        %957 = vadd.xlane.f32.xlu0 %v956
        %v958 = vpop.xlane.xlu0 %957
        %v959 = vsel %vm900, %v945, 0.0
        %960 = vadd.xlane.f32.xlu0 %v959
        %v961 = vpop.xlane.xlu0 %960
        %v962 = vsel %vm900, %v946, 0.0
        %963 = vadd.xlane.f32.xlu0 %v962
        %v964 = vpop.xlane.xlu0 %963
        %v965 = vsel %vm900, %v947, 0.0
        %966 = vadd.xlane.f32.xlu0 %v965
        %v967 = vpop.xlane.xlu0 %966
        %v968 = vsel %vm900, %v948, 0.0
        %969 = vadd.xlane.f32.xlu0 %v968
        %v970 = vpop.xlane.xlu0 %969
        %v971 = vsel %vm900, %v949, 0.0
        %972 = vadd.xlane.f32.xlu0 %v971
        %v973 = vpop.xlane.xlu0 %972
        %v974 = vmul.f32 %v952, %v925
        %v975 = vmul.f32 %v955, %v925
        %v976 = vmul.f32 %v958, %v925
        %v977 = vmul.f32 %v961, %v925
        %v978 = vmul.f32 %v964, %v925
        %v979 = vmul.f32 %v967, %v925
        %v980 = vmul.f32 %v970, %v925
        %v981 = vmul.f32 %v973, %v925
        %v982 = vadd.f32 %v974, 1e-05
        %v983 = vadd.f32 %v975, 1e-05
        %v984 = vadd.f32 %v976, 1e-05
        %v985 = vadd.f32 %v977, 1e-05
        %v986 = vadd.f32 %v978, 1e-05
        %v987 = vadd.f32 %v979, 1e-05
        %v988 = vadd.f32 %v980, 1e-05
        %v989 = vadd.f32 %v981, 1e-05
        %v990 = vrsqrt.pop %v982
        %v991 = vrsqrt.pop %v983
        %v992 = vrsqrt.pop %v984
        %v993 = vrsqrt.pop %v985
        %v994 = vrsqrt.pop %v986
        %v995 = vrsqrt.pop %v987
        %v996 = vrsqrt.pop %v988
        %v997 = vrsqrt.pop %v989
        %v998 = vmul.f32 %v934, %v990
        %v999 = vmul.f32 %v935, %v991
        %v1000 = vmul.f32 %v936, %v992
        %v1001 = vmul.f32 %v937, %v993
        %v1002 = vmul.f32 %v938, %v994
        %v1003 = vmul.f32 %v939, %v995
        %v1004 = vmul.f32 %v940, %v996
        %v1005 = vmul.f32 %v941, %v997
        %v1006 = vld [vmem:[%s4] sm:$0xff]
        %v1007 = vld [vmem:[%s4 + $0x8] sm:$0xff]
        %v1008 = vld [vmem:[%s4 + $0x10] sm:$0xff]
        %v1009 = vld [vmem:[%s4 + $0x18] sm:$0xff]
        %v1010 = vld [vmem:[%s4 + $0x20] sm:$0xff]
        %v1011 = vld [vmem:[%s4 + $0x28] sm:$0xff]
        %v1012 = vld [vmem:[%s4 + $0x30] sm:$0xff]
        %v1013 = vld [vmem:[%s4 + $0x38] sm:$0xff]
        %1015 = vset.pattern.permute.xlu0 0
        %1016 = vperm.xlu0 %1015, %v1006
        %v1017 = vpop.permute.xlu0 %1016
        %1020 = vset.pattern.permute.xlu0 0
        %1021 = vperm.xlu0 %1020, %v1007
        %v1022 = vpop.permute.xlu0 %1021
        %1025 = vset.pattern.permute.xlu0 0
        %1026 = vperm.xlu0 %1025, %v1008
        %v1027 = vpop.permute.xlu0 %1026
        %1030 = vset.pattern.permute.xlu0 0
        %1031 = vperm.xlu0 %1030, %v1009
        %v1032 = vpop.permute.xlu0 %1031
        %1035 = vset.pattern.permute.xlu0 0
        %1036 = vperm.xlu0 %1035, %v1010
        %v1037 = vpop.permute.xlu0 %1036
        %1040 = vset.pattern.permute.xlu0 0
        %1041 = vperm.xlu0 %1040, %v1011
        %v1042 = vpop.permute.xlu0 %1041
        %1045 = vset.pattern.permute.xlu0 0
        %1046 = vperm.xlu0 %1045, %v1012
        %v1047 = vpop.permute.xlu0 %1046
        %1050 = vset.pattern.permute.xlu0 0
        %1051 = vperm.xlu0 %1050, %v1013
        %v1052 = vpop.permute.xlu0 %1051
        %v1054 = vmul.f32 %v998, %v1017
        %v1055 = vmul.f32 %v999, %v1022
        %v1056 = vmul.f32 %v1000, %v1027
        %v1057 = vmul.f32 %v1001, %v1032
        %v1058 = vmul.f32 %v1002, %v1037
        %v1059 = vmul.f32 %v1003, %v1042
        %v1060 = vmul.f32 %v1004, %v1047
        %v1061 = vmul.f32 %v1005, %v1052
        %v1062 = vld [vmem:[%s5] sm:$0xff]
        %v1063 = vld [vmem:[%s5 + $0x8] sm:$0xff]
        %v1064 = vld [vmem:[%s5 + $0x10] sm:$0xff]
        %v1065 = vld [vmem:[%s5 + $0x18] sm:$0xff]
        %v1066 = vld [vmem:[%s5 + $0x20] sm:$0xff]
        %v1067 = vld [vmem:[%s5 + $0x28] sm:$0xff]
        %v1068 = vld [vmem:[%s5 + $0x30] sm:$0xff]
        %v1069 = vld [vmem:[%s5 + $0x38] sm:$0xff]
        %1071 = vset.pattern.permute.xlu0 0
        %1072 = vperm.xlu0 %1071, %v1062
        %v1073 = vpop.permute.xlu0 %1072
        %1076 = vset.pattern.permute.xlu0 0
        %1077 = vperm.xlu0 %1076, %v1063
        %v1078 = vpop.permute.xlu0 %1077
        %1081 = vset.pattern.permute.xlu0 0
        %1082 = vperm.xlu0 %1081, %v1064
        %v1083 = vpop.permute.xlu0 %1082
        %1086 = vset.pattern.permute.xlu0 0
        %1087 = vperm.xlu0 %1086, %v1065
        %v1088 = vpop.permute.xlu0 %1087
        %1091 = vset.pattern.permute.xlu0 0
        %1092 = vperm.xlu0 %1091, %v1066
        %v1093 = vpop.permute.xlu0 %1092
        %1096 = vset.pattern.permute.xlu0 0
        %1097 = vperm.xlu0 %1096, %v1067
        %v1098 = vpop.permute.xlu0 %1097
        %1101 = vset.pattern.permute.xlu0 0
        %1102 = vperm.xlu0 %1101, %v1068
        %v1103 = vpop.permute.xlu0 %1102
        %1106 = vset.pattern.permute.xlu0 0
        %1107 = vperm.xlu0 %1106, %v1069
        %v1108 = vpop.permute.xlu0 %1107
        %v1110 = vadd.f32 %v1054, %v1073
        %v1111 = vadd.f32 %v1055, %v1078
        %v1112 = vadd.f32 %v1056, %v1083
        %v1113 = vadd.f32 %v1057, %v1088
        %v1114 = vadd.f32 %v1058, %v1093
        %v1115 = vadd.f32 %v1059, %v1098
        %v1116 = vadd.f32 %v1060, %v1103
        %v1117 = vadd.f32 %v1061, %v1108
        %v1118 = vmax.f32 %v1110, 0.0
        %v1119 = vmax.f32 %v1111, 0.0
        %v1120 = vmax.f32 %v1112, 0.0
        %v1121 = vmax.f32 %v1113, 0.0
        %v1122 = vmax.f32 %v1114, 0.0
        %v1123 = vmax.f32 %v1115, 0.0
        %v1124 = vmax.f32 %v1116, 0.0
        %v1125 = vmax.f32 %v1117, 0.0
        %v1126 = vld [vmem:[%s6] sm:$0xff]
        %v1127 = vld [vmem:[%s6 + $0x8] sm:$0xff]
        %v1128 = vld [vmem:[%s6 + $0x10] sm:$0xff]
        %v1129 = vld [vmem:[%s6 + $0x18] sm:$0xff]
        %v1130 = vld [vmem:[%s6 + $0x20] sm:$0xf]
        %v1132 = vsel %vm900, %v1118, 0
        %v1135 = vsel %vm900, %v1119, 0
        %v1138 = vsel %vm900, %v1120, 0
        %v1141 = vsel %vm900, %v1121, 0
        %v1144 = vsel %vm900, %v1122, 0
        %v1147 = vsel %vm900, %v1123, 0
        %v1150 = vsel %vm900, %v1124, 0
        %v1153 = vsel %vm900, %v1125, 0
        %vm1155 = vcmask 1043456
        %v1157 = vsel %vm1155, %v1130, 0
        %1159 = vmatprep.subr.mxu0 0.0
        %1160 = vmatpush1.msra.mxu0 %v1126
        %1161 = vmatprep.subr.mxu0 0.0
        %1162 = vmatpush1.msra.mxu0 %v1127
        %1163 = vmatprep.subr.mxu0 0.0
        %1164 = vmatpush1.msra.mxu0 %v1128
        %1165 = vmatprep.subr.mxu0 0.0
        %1166 = vmatpush1.msra.mxu0 %v1129
        %1167 = vmatprep.subr.mxu0 0.0
        %1168 = vmatpush1.msra.mxu0 %v1157
        %1169 = vmatprep.subr.mxu0 0.0
        %1170 = vmatpush1.msra.mxu0 0.0
        %1171 = vmatprep.subr.mxu0 0.0
        %1172 = vmatpush1.msra.mxu0 0.0
        %1173 = vmatprep.subr.mxu0 0.0
        %1174 = vmatpush1.msra.mxu0 0.0
        %1175 = vmatprep.subr.mxu0 0.0
        %1176 = vmatpush1.msra.mxu0 0.0
        %1177 = vmatprep.subr.mxu0 0.0
        %1178 = vmatpush1.msra.mxu0 0.0
        %1179 = vmatprep.subr.mxu0 0.0
        %1180 = vmatpush1.msra.mxu0 0.0
        %1181 = vmatprep.subr.mxu0 0.0
        %1182 = vmatpush1.msra.mxu0 0.0
        %1183 = vmatprep.subr.mxu0 0.0
        %1184 = vmatpush1.msra.mxu0 0.0
        %1185 = vmatprep.subr.mxu0 0.0
        %1186 = vmatpush1.msra.mxu0 0.0
        %1187 = vmatprep.subr.mxu0 0.0
        %1188 = vmatpush1.msra.mxu0 0.0
        %1189 = vmatprep.subr.mxu0 0.0
        %1190 = vmatpush1.msra.mxu0 0.0
        %1191 = vmatprep.subr.mxu0 0.0
        %1192 = vmatpush1.msra.mxu0 0.0
        %1193 = vmatprep.subr.mxu0 0.0
        %1194 = vmatpush1.msra.mxu0 0.0
        %1195 = vmatprep.subr.mxu0 0.0
        %1196 = vmatpush1.msra.mxu0 0.0
        %1197 = vmatprep.subr.mxu0 0.0
        %1198 = vmatpush1.msra.mxu0 0.0
        %1199 = vmatprep.subr.mxu0 0.0
        %1200 = vmatpush1.msra.mxu0 0.0
        %1201 = vmatprep.subr.mxu0 0.0
        %1202 = vmatpush1.msra.mxu0 0.0
        %1203 = vmatprep.subr.mxu0 0.0
        %1204 = vmatpush1.msra.mxu0 0.0
        %1205 = vmatprep.subr.mxu0 0.0
        %1206 = vmatpush1.msra.mxu0 0.0
        %1207 = vmatprep.subr.mxu0 0.0
        %1208 = vmatpush1.msra.mxu0 0.0
        %1209 = vmatprep.subr.mxu0 0.0
        %1210 = vmatpush1.msra.mxu0 0.0
        %1211 = vmatprep.subr.mxu0 0.0
        %1212 = vmatpush1.msra.mxu0 0.0
        %1213 = vmatprep.subr.mxu0 0.0
        %1214 = vmatpush1.msra.mxu0 0.0
        %1215 = vmatprep.subr.mxu0 0.0
        %1216 = vmatpush1.msra.mxu0 0.0
        %1217 = vmatprep.subr.mxu0 0.0
        %1218 = vmatpush1.msra.mxu0 0.0
        %1219 = vmatprep.subr.mxu0 0.0
        %1220 = vmatpush1.msra.mxu0 0.0
        %1221 = vmatprep.subr.mxu0 0.0
        %1222 = vmatpush1.msra.mxu0 0.0
        %1223 = vmatprep.mubr.f32.mxu0 0.0
        %1224 = vmatmul.mubr.f32.gmra.mrb[0].mxu0 %v1132
        %v1225 = vpop.f32.mrb[0].mxu0
        %v1226 = vadd.f32 0.0, %v1225
        %v1227 = vpop.f32.mrb[0].mxu0
        %1228 = vmatprep.mubr.f32.mxu0 0.0
        %1229 = vmatmul.mubr.f32.gmra.mrb[0].mxu0 %v1135
        %v1230 = vpop.f32.mrb[0].mxu0
        %v1231 = vadd.f32 0.0, %v1230
        %v1232 = vpop.f32.mrb[0].mxu0
        %1233 = vmatprep.mubr.f32.mxu0 0.0
        %1234 = vmatmul.mubr.f32.gmra.mrb[0].mxu0 %v1138
        %v1235 = vpop.f32.mrb[0].mxu0
        %v1236 = vadd.f32 0.0, %v1235
        %v1237 = vpop.f32.mrb[0].mxu0
        %1238 = vmatprep.mubr.f32.mxu0 0.0
        %1239 = vmatmul.mubr.f32.gmra.mrb[0].mxu0 %v1141
        %v1240 = vpop.f32.mrb[0].mxu0
        %v1241 = vadd.f32 0.0, %v1240
        %v1242 = vpop.f32.mrb[0].mxu0
        %1243 = vmatprep.mubr.f32.mxu0 0.0
        %1244 = vmatmul.mubr.f32.gmra.mrb[0].mxu0 %v1144
        %v1245 = vpop.f32.mrb[0].mxu0
        %v1246 = vadd.f32 0.0, %v1245
        %v1247 = vpop.f32.mrb[0].mxu0
        %1248 = vmatprep.mubr.f32.mxu0 0.0
        %1249 = vmatmul.mubr.f32.gmra.mrb[0].mxu0 %v1147
        %v1250 = vpop.f32.mrb[0].mxu0
        %v1251 = vadd.f32 0.0, %v1250
        %v1252 = vpop.f32.mrb[0].mxu0
        %1253 = vmatprep.mubr.f32.mxu0 0.0
        %1254 = vmatmul.mubr.f32.gmra.mrb[0].mxu0 %v1150
        %v1255 = vpop.f32.mrb[0].mxu0
        %v1256 = vadd.f32 0.0, %v1255
        %v1257 = vpop.f32.mrb[0].mxu0
        %1258 = vmatprep.mubr.f32.mxu0 0.0
        %1259 = vmatmul.mubr.f32.gmra.mrb[0].mxu0 %v1153
        %v1260 = vpop.f32.mrb[0].mxu0
        %v1261 = vadd.f32 0.0, %v1260
        %v1262 = vpop.f32.mrb[0].mxu0
        %1263 = vdwg.mxu0
        %1272 = vrot.lane.b32.xlu0 %v1226, 127
        %v1273 = vpop.permute.xlu0 %1272
        %1274 = vrot.lane.b32.xlu0 %v1231, 127
        %v1275 = vpop.permute.xlu0 %1274
        %1276 = vrot.lane.b32.xlu0 %v1236, 127
        %v1277 = vpop.permute.xlu0 %1276
        %1278 = vrot.lane.b32.xlu0 %v1241, 127
        %v1279 = vpop.permute.xlu0 %1278
        %1280 = vrot.lane.b32.xlu0 %v1246, 127
        %v1281 = vpop.permute.xlu0 %1280
        %1282 = vrot.lane.b32.xlu0 %v1251, 127
        %v1283 = vpop.permute.xlu0 %1282
        %1284 = vrot.lane.b32.xlu0 %v1256, 127
        %v1285 = vpop.permute.xlu0 %1284
        %1286 = vrot.lane.b32.xlu0 %v1261, 127
        %v1287 = vpop.permute.xlu0 %1286
        %1296 = vrot.lane.b32.xlu0 %v1226, 126
        %v1297 = vpop.permute.xlu0 %1296
        %1298 = vrot.lane.b32.xlu0 %v1231, 126
        %v1299 = vpop.permute.xlu0 %1298
        %1300 = vrot.lane.b32.xlu0 %v1236, 126
        %v1301 = vpop.permute.xlu0 %1300
        %1302 = vrot.lane.b32.xlu0 %v1241, 126
        %v1303 = vpop.permute.xlu0 %1302
        %1304 = vrot.lane.b32.xlu0 %v1246, 126
        %v1305 = vpop.permute.xlu0 %1304
        %1306 = vrot.lane.b32.xlu0 %v1251, 126
        %v1307 = vpop.permute.xlu0 %1306
        %1308 = vrot.lane.b32.xlu0 %v1256, 126
        %v1309 = vpop.permute.xlu0 %1308
        %1310 = vrot.lane.b32.xlu0 %v1261, 126
        %v1311 = vpop.permute.xlu0 %1310
        %v1320 = vld [vmem:[%s7] sm:$0xff]
        %v1321 = vld [vmem:[%s7 + $0x8] sm:$0xff]
        %v1322 = vld [vmem:[%s7 + $0x10] sm:$0xff]
        %v1323 = vld [vmem:[%s7 + $0x18] sm:$0xff]
        %v1324 = vld [vmem:[%s7 + $0x20] sm:$0xff]
        %v1325 = vld [vmem:[%s7 + $0x28] sm:$0xff]
        %v1326 = vld [vmem:[%s7 + $0x30] sm:$0xff]
        %v1327 = vld [vmem:[%s7 + $0x38] sm:$0xff]
        %v1328 = vpack.c.bf16 %v1231, %v1226
        %v1329 = vpack.c.bf16 %v1241, %v1236
        %v1330 = vpack.c.bf16 %v1251, %v1246
        %v1331 = vpack.c.bf16 %v1261, %v1256
        %v1332 = vpack.c.bf16 %v1275, %v1273
        %v1333 = vpack.c.bf16 %v1279, %v1277
        %v1334 = vpack.c.bf16 %v1283, %v1281
        %v1335 = vpack.c.bf16 %v1287, %v1285
        %v1336 = vpack.c.bf16 %v1299, %v1297
        %v1337 = vpack.c.bf16 %v1303, %v1301
        %v1338 = vpack.c.bf16 %v1307, %v1305
        %v1339 = vpack.c.bf16 %v1311, %v1309
        %v1340 = vld [vmem:[%s8] sm:$0xff]
        %v1341 = vld [vmem:[%s8 + $0x8] sm:$0xff]
        %v1342 = vld [vmem:[%s8 + $0x10] sm:$0xff]
        %v1343 = vld [vmem:[%s8 + $0x18] sm:$0xff]
        %v1344 = vld [vmem:[%s8 + $0x20] sm:$0xff]
        %v1345 = vld [vmem:[%s8 + $0x28] sm:$0xff]
        %v1346 = vld [vmem:[%s8 + $0x30] sm:$0xff]
        %v1347 = vld [vmem:[%s8 + $0x38] sm:$0xff]
        %1349 = vset.pattern.permute.xlu0 0
        %1350 = vperm.xlu0 %1349, %v1340
        %v1351 = vpop.permute.xlu0 %1350
        %1354 = vset.pattern.permute.xlu0 0
        %1355 = vperm.xlu0 %1354, %v1341
        %v1356 = vpop.permute.xlu0 %1355
        %1359 = vset.pattern.permute.xlu0 0
        %1360 = vperm.xlu0 %1359, %v1342
        %v1361 = vpop.permute.xlu0 %1360
        %1364 = vset.pattern.permute.xlu0 0
        %1365 = vperm.xlu0 %1364, %v1343
        %v1366 = vpop.permute.xlu0 %1365
        %1369 = vset.pattern.permute.xlu0 0
        %1370 = vperm.xlu0 %1369, %v1344
        %v1371 = vpop.permute.xlu0 %1370
        %1374 = vset.pattern.permute.xlu0 0
        %1375 = vperm.xlu0 %1374, %v1345
        %v1376 = vpop.permute.xlu0 %1375
        %1379 = vset.pattern.permute.xlu0 0
        %1380 = vperm.xlu0 %1379, %v1346
        %v1381 = vpop.permute.xlu0 %1380
        %1384 = vset.pattern.permute.xlu0 0
        %1385 = vperm.xlu0 %1384, %v1347
        %v1386 = vpop.permute.xlu0 %1385
        %v1396 = vunpack.c.l.b16 %v1320
        %v1397 = vunpack.c.h.b16 %v1320
        %v1398 = vunpack.c.l.b16 %v1321
        %v1399 = vunpack.c.h.b16 %v1321
        %v1400 = vunpack.c.l.b16 %v1322
        %v1401 = vunpack.c.h.b16 %v1322
        %v1402 = vunpack.c.l.b16 %v1323
        %v1403 = vunpack.c.h.b16 %v1323
        %v1404 = vunpack.c.l.b16 %v1324
        %v1405 = vunpack.c.h.b16 %v1324
        %v1406 = vunpack.c.l.b16 %v1325
        %v1407 = vunpack.c.h.b16 %v1325
        %v1408 = vunpack.c.l.b16 %v1326
        %v1409 = vunpack.c.h.b16 %v1326
        %v1410 = vunpack.c.l.b16 %v1327
        %v1411 = vunpack.c.h.b16 %v1327
        %v1412 = vpack.c.b16 %v1398, %v1396
        %v1413 = vpack.c.b16 %v1399, %v1397
        %v1414 = vpack.c.b16 %v1402, %v1400
        %v1415 = vpack.c.b16 %v1403, %v1401
        %v1416 = vpack.c.b16 %v1406, %v1404
        %v1417 = vpack.c.b16 %v1407, %v1405
        %v1418 = vpack.c.b16 %v1410, %v1408
        %v1419 = vpack.c.b16 %v1411, %v1409
        %v1425 = vsel %vm822, %v1413, 0
        %v1428 = vsel %vm822, %v1415, 0
        %v1431 = vsel %vm822, %v1417, 0
        %v1434 = vsel %vm822, %v1419, 0
        %1436 = vmatprep.subr.bf16.mxu0 0
        %1437 = vmatpush1.bf16.msra.mxu0 %v1328
        %1438 = vmatprep.subr.bf16.mxu0 0
        %1439 = vmatpush1.bf16.msra.mxu0 %v1329
        %1440 = vmatprep.subr.bf16.mxu0 0
        %1441 = vmatpush1.bf16.msra.mxu0 %v1330
        %1442 = vmatprep.subr.bf16.mxu0 0
        %1443 = vmatpush1.bf16.msra.mxu0 %v1331
        %1444 = vmatprep.subr.bf16.mxu0 0
        %1445 = vmatpush1.bf16.msra.mxu0 %v1332
        %1446 = vmatprep.subr.bf16.mxu0 0
        %1447 = vmatpush1.bf16.msra.mxu0 %v1333
        %1448 = vmatprep.subr.bf16.mxu0 0
        %1449 = vmatpush1.bf16.msra.mxu0 %v1334
        %1450 = vmatprep.subr.bf16.mxu0 0
        %1451 = vmatpush1.bf16.msra.mxu0 %v1335
        %1452 = vmatprep.subr.bf16.mxu0 0
        %1453 = vmatpush1.bf16.msra.mxu0 %v1336
        %1454 = vmatprep.subr.bf16.mxu0 0
        %1455 = vmatpush1.bf16.msra.mxu0 %v1337
        %1456 = vmatprep.subr.bf16.mxu0 0
        %1457 = vmatpush1.bf16.msra.mxu0 %v1338
        %1458 = vmatprep.subr.bf16.mxu0 0
        %1459 = vmatpush1.bf16.msra.mxu0 %v1339
        %1460 = vmatprep.subr.bf16.mxu0 0
        %1461 = vmatpush1.bf16.msra.mxu0 0
        %1462 = vmatprep.subr.bf16.mxu0 0
        %1463 = vmatpush1.bf16.msra.mxu0 0
        %1464 = vmatprep.subr.bf16.mxu0 0
        %1465 = vmatpush1.bf16.msra.mxu0 0
        %1466 = vmatprep.subr.bf16.mxu0 0
        %1467 = vmatpush1.bf16.msra.mxu0 0
        %1468 = vmatprep.mubr.bf16.mxu0 %v1425
        %1469 = vmatmul.mubr.bf16.gmra.mrb[0].mxu0 %v1412
        %v1470 = vpop.f32.mrb[0].mxu0
        %v1471 = vadd.f32 %v1351, %v1470
        %v1472 = vpop.f32.mrb[0].mxu0
        %v1473 = vpop.f32.mrb[0].mxu0
        %v1474 = vadd.f32 %v1356, %v1473
        %v1475 = vpop.f32.mrb[0].mxu0
        %1476 = vmatprep.mubr.bf16.mxu0 %v1428
        %1477 = vmatmul.mubr.bf16.gmra.mrb[0].mxu0 %v1414
        %v1478 = vpop.f32.mrb[0].mxu0
        %v1479 = vadd.f32 %v1361, %v1478
        %v1480 = vpop.f32.mrb[0].mxu0
        %v1481 = vpop.f32.mrb[0].mxu0
        %v1482 = vadd.f32 %v1366, %v1481
        %v1483 = vpop.f32.mrb[0].mxu0
        %1484 = vmatprep.mubr.bf16.mxu0 %v1431
        %1485 = vmatmul.mubr.bf16.gmra.mrb[0].mxu0 %v1416
        %v1486 = vpop.f32.mrb[0].mxu0
        %v1487 = vadd.f32 %v1371, %v1486
        %v1488 = vpop.f32.mrb[0].mxu0
        %v1489 = vpop.f32.mrb[0].mxu0
        %v1490 = vadd.f32 %v1376, %v1489
        %v1491 = vpop.f32.mrb[0].mxu0
        %1492 = vmatprep.mubr.bf16.mxu0 %v1434
        %1493 = vmatmul.mubr.bf16.gmra.mrb[0].mxu0 %v1418
        %v1494 = vpop.f32.mrb[0].mxu0
        %v1495 = vadd.f32 %v1381, %v1494
        %v1496 = vpop.f32.mrb[0].mxu0
        %v1497 = vpop.f32.mrb[0].mxu0
        %v1498 = vadd.f32 %v1386, %v1497
        %v1499 = vpop.f32.mrb[0].mxu0
        %1500 = vdwg.mxu0
        %vm1501 = vcmask 146432
        %v1502 = vsel %vm1501, %v1471, 0.0
        %1503 = vadd.xlane.f32.xlu0 %v1502
        %v1504 = vpop.xlane.xlu0 %1503
        %v1505 = vsel %vm1501, %v1474, 0.0
        %1506 = vadd.xlane.f32.xlu0 %v1505
        %v1507 = vpop.xlane.xlu0 %1506
        %v1508 = vsel %vm1501, %v1479, 0.0
        %1509 = vadd.xlane.f32.xlu0 %v1508
        %v1510 = vpop.xlane.xlu0 %1509
        %v1511 = vsel %vm1501, %v1482, 0.0
        %1512 = vadd.xlane.f32.xlu0 %v1511
        %v1513 = vpop.xlane.xlu0 %1512
        %v1514 = vsel %vm1501, %v1487, 0.0
        %1515 = vadd.xlane.f32.xlu0 %v1514
        %v1516 = vpop.xlane.xlu0 %1515
        %v1517 = vsel %vm1501, %v1490, 0.0
        %1518 = vadd.xlane.f32.xlu0 %v1517
        %v1519 = vpop.xlane.xlu0 %1518
        %v1520 = vsel %vm1501, %v1495, 0.0
        %1521 = vadd.xlane.f32.xlu0 %v1520
        %v1522 = vpop.xlane.xlu0 %1521
        %v1523 = vsel %vm1501, %v1498, 0.0
        %1524 = vadd.xlane.f32.xlu0 %v1523
        %v1525 = vpop.xlane.xlu0 %1524
        %v1526 = vrcp.pop 18.0
        %v1527 = vmul.f32 %v1504, %v1526
        %v1528 = vmul.f32 %v1507, %v1526
        %v1529 = vmul.f32 %v1510, %v1526
        %v1530 = vmul.f32 %v1513, %v1526
        %v1531 = vmul.f32 %v1516, %v1526
        %v1532 = vmul.f32 %v1519, %v1526
        %v1533 = vmul.f32 %v1522, %v1526
        %v1534 = vmul.f32 %v1525, %v1526
        %v1535 = vsub.f32 %v1471, %v1527
        %v1536 = vsub.f32 %v1474, %v1528
        %v1537 = vsub.f32 %v1479, %v1529
        %v1538 = vsub.f32 %v1482, %v1530
        %v1539 = vsub.f32 %v1487, %v1531
        %v1540 = vsub.f32 %v1490, %v1532
        %v1541 = vsub.f32 %v1495, %v1533
        %v1542 = vsub.f32 %v1498, %v1534
        %v1543 = vmul.f32 %v1535, %v1535
        %v1544 = vmul.f32 %v1536, %v1536
        %v1545 = vmul.f32 %v1537, %v1537
        %v1546 = vmul.f32 %v1538, %v1538
        %v1547 = vmul.f32 %v1539, %v1539
        %v1548 = vmul.f32 %v1540, %v1540
        %v1549 = vmul.f32 %v1541, %v1541
        %v1550 = vmul.f32 %v1542, %v1542
        %v1551 = vsel %vm1501, %v1543, 0.0
        %1552 = vadd.xlane.f32.xlu0 %v1551
        %v1553 = vpop.xlane.xlu0 %1552
        %v1554 = vsel %vm1501, %v1544, 0.0
        %1555 = vadd.xlane.f32.xlu0 %v1554
        %v1556 = vpop.xlane.xlu0 %1555
        %v1557 = vsel %vm1501, %v1545, 0.0
        %1558 = vadd.xlane.f32.xlu0 %v1557
        %v1559 = vpop.xlane.xlu0 %1558
        %v1560 = vsel %vm1501, %v1546, 0.0
        %1561 = vadd.xlane.f32.xlu0 %v1560
        %v1562 = vpop.xlane.xlu0 %1561
        %v1563 = vsel %vm1501, %v1547, 0.0
        %1564 = vadd.xlane.f32.xlu0 %v1563
        %v1565 = vpop.xlane.xlu0 %1564
        %v1566 = vsel %vm1501, %v1548, 0.0
        %1567 = vadd.xlane.f32.xlu0 %v1566
        %v1568 = vpop.xlane.xlu0 %1567
        %v1569 = vsel %vm1501, %v1549, 0.0
        %1570 = vadd.xlane.f32.xlu0 %v1569
        %v1571 = vpop.xlane.xlu0 %1570
        %v1572 = vsel %vm1501, %v1550, 0.0
        %1573 = vadd.xlane.f32.xlu0 %v1572
        %v1574 = vpop.xlane.xlu0 %1573
        %v1575 = vmul.f32 %v1553, %v1526
        %v1576 = vmul.f32 %v1556, %v1526
        %v1577 = vmul.f32 %v1559, %v1526
        %v1578 = vmul.f32 %v1562, %v1526
        %v1579 = vmul.f32 %v1565, %v1526
        %v1580 = vmul.f32 %v1568, %v1526
        %v1581 = vmul.f32 %v1571, %v1526
        %v1582 = vmul.f32 %v1574, %v1526
        %v1583 = vadd.f32 %v1575, 1e-05
        %v1584 = vadd.f32 %v1576, 1e-05
        %v1585 = vadd.f32 %v1577, 1e-05
        %v1586 = vadd.f32 %v1578, 1e-05
        %v1587 = vadd.f32 %v1579, 1e-05
        %v1588 = vadd.f32 %v1580, 1e-05
        %v1589 = vadd.f32 %v1581, 1e-05
        %v1590 = vadd.f32 %v1582, 1e-05
        %v1591 = vrsqrt.pop %v1583
        %v1592 = vrsqrt.pop %v1584
        %v1593 = vrsqrt.pop %v1585
        %v1594 = vrsqrt.pop %v1586
        %v1595 = vrsqrt.pop %v1587
        %v1596 = vrsqrt.pop %v1588
        %v1597 = vrsqrt.pop %v1589
        %v1598 = vrsqrt.pop %v1590
        %v1599 = vmul.f32 %v1535, %v1591
        %v1600 = vmul.f32 %v1536, %v1592
        %v1601 = vmul.f32 %v1537, %v1593
        %v1602 = vmul.f32 %v1538, %v1594
        %v1603 = vmul.f32 %v1539, %v1595
        %v1604 = vmul.f32 %v1540, %v1596
        %v1605 = vmul.f32 %v1541, %v1597
        %v1606 = vmul.f32 %v1542, %v1598
        %v1607 = vld [vmem:[%s9] sm:$0xff]
        %v1608 = vld [vmem:[%s9 + $0x8] sm:$0xff]
        %v1609 = vld [vmem:[%s9 + $0x10] sm:$0xff]
        %v1610 = vld [vmem:[%s9 + $0x18] sm:$0xff]
        %v1611 = vld [vmem:[%s9 + $0x20] sm:$0xff]
        %v1612 = vld [vmem:[%s9 + $0x28] sm:$0xff]
        %v1613 = vld [vmem:[%s9 + $0x30] sm:$0xff]
        %v1614 = vld [vmem:[%s9 + $0x38] sm:$0xff]
        %1616 = vset.pattern.permute.xlu0 0
        %1617 = vperm.xlu0 %1616, %v1607
        %v1618 = vpop.permute.xlu0 %1617
        %1621 = vset.pattern.permute.xlu0 0
        %1622 = vperm.xlu0 %1621, %v1608
        %v1623 = vpop.permute.xlu0 %1622
        %1626 = vset.pattern.permute.xlu0 0
        %1627 = vperm.xlu0 %1626, %v1609
        %v1628 = vpop.permute.xlu0 %1627
        %1631 = vset.pattern.permute.xlu0 0
        %1632 = vperm.xlu0 %1631, %v1610
        %v1633 = vpop.permute.xlu0 %1632
        %1636 = vset.pattern.permute.xlu0 0
        %1637 = vperm.xlu0 %1636, %v1611
        %v1638 = vpop.permute.xlu0 %1637
        %1641 = vset.pattern.permute.xlu0 0
        %1642 = vperm.xlu0 %1641, %v1612
        %v1643 = vpop.permute.xlu0 %1642
        %1646 = vset.pattern.permute.xlu0 0
        %1647 = vperm.xlu0 %1646, %v1613
        %v1648 = vpop.permute.xlu0 %1647
        %1651 = vset.pattern.permute.xlu0 0
        %1652 = vperm.xlu0 %1651, %v1614
        %v1653 = vpop.permute.xlu0 %1652
        %v1655 = vmul.f32 %v1599, %v1618
        %v1656 = vmul.f32 %v1600, %v1623
        %v1657 = vmul.f32 %v1601, %v1628
        %v1658 = vmul.f32 %v1602, %v1633
        %v1659 = vmul.f32 %v1603, %v1638
        %v1660 = vmul.f32 %v1604, %v1643
        %v1661 = vmul.f32 %v1605, %v1648
        %v1662 = vmul.f32 %v1606, %v1653
        %v1663 = vld [vmem:[%s10] sm:$0xff]
        %v1664 = vld [vmem:[%s10 + $0x8] sm:$0xff]
        %v1665 = vld [vmem:[%s10 + $0x10] sm:$0xff]
        %v1666 = vld [vmem:[%s10 + $0x18] sm:$0xff]
        %v1667 = vld [vmem:[%s10 + $0x20] sm:$0xff]
        %v1668 = vld [vmem:[%s10 + $0x28] sm:$0xff]
        %v1669 = vld [vmem:[%s10 + $0x30] sm:$0xff]
        %v1670 = vld [vmem:[%s10 + $0x38] sm:$0xff]
        %1672 = vset.pattern.permute.xlu0 0
        %1673 = vperm.xlu0 %1672, %v1663
        %v1674 = vpop.permute.xlu0 %1673
        %1677 = vset.pattern.permute.xlu0 0
        %1678 = vperm.xlu0 %1677, %v1664
        %v1679 = vpop.permute.xlu0 %1678
        %1682 = vset.pattern.permute.xlu0 0
        %1683 = vperm.xlu0 %1682, %v1665
        %v1684 = vpop.permute.xlu0 %1683
        %1687 = vset.pattern.permute.xlu0 0
        %1688 = vperm.xlu0 %1687, %v1666
        %v1689 = vpop.permute.xlu0 %1688
        %1692 = vset.pattern.permute.xlu0 0
        %1693 = vperm.xlu0 %1692, %v1667
        %v1694 = vpop.permute.xlu0 %1693
        %1697 = vset.pattern.permute.xlu0 0
        %1698 = vperm.xlu0 %1697, %v1668
        %v1699 = vpop.permute.xlu0 %1698
        %1702 = vset.pattern.permute.xlu0 0
        %1703 = vperm.xlu0 %1702, %v1669
        %v1704 = vpop.permute.xlu0 %1703
        %1707 = vset.pattern.permute.xlu0 0
        %1708 = vperm.xlu0 %1707, %v1670
        %v1709 = vpop.permute.xlu0 %1708
        %v1711 = vadd.f32 %v1655, %v1674
        %v1712 = vadd.f32 %v1656, %v1679
        %v1713 = vadd.f32 %v1657, %v1684
        %v1714 = vadd.f32 %v1658, %v1689
        %v1715 = vadd.f32 %v1659, %v1694
        %v1716 = vadd.f32 %v1660, %v1699
        %v1717 = vadd.f32 %v1661, %v1704
        %v1718 = vadd.f32 %v1662, %v1709
        %v1719 = vmax.f32 %v1711, 0.0
        %v1720 = vmax.f32 %v1712, 0.0
        %v1721 = vmax.f32 %v1713, 0.0
        %v1722 = vmax.f32 %v1714, 0.0
        %v1723 = vmax.f32 %v1715, 0.0
        %v1724 = vmax.f32 %v1716, 0.0
        %v1725 = vmax.f32 %v1717, 0.0
        %v1726 = vmax.f32 %v1718, 0.0
        %v1727 = vld [vmem:[%s11] sm:$0xff]
        %v1728 = vld [vmem:[%s11 + $0x8] sm:$0xff]
        %v1729 = vld [vmem:[%s11 + $0x10] sm:$0x3]
        %v1731 = vsel %vm1501, %v1719, 0
        %v1734 = vsel %vm1501, %v1720, 0
        %v1737 = vsel %vm1501, %v1721, 0
        %v1740 = vsel %vm1501, %v1722, 0
        %v1743 = vsel %vm1501, %v1723, 0
        %v1746 = vsel %vm1501, %v1724, 0
        %v1749 = vsel %vm1501, %v1725, 0
        %v1752 = vsel %vm1501, %v1726, 0
        %vm1754 = vcmask 1041408
        %v1756 = vsel %vm1754, %v1729, 0
        %1758 = vmatprep.subr.mxu0 0.0
        %1759 = vmatpush1.msra.mxu0 %v1727
        %1760 = vmatprep.subr.mxu0 0.0
        %1761 = vmatpush1.msra.mxu0 %v1728
        %1762 = vmatprep.subr.mxu0 0.0
        %1763 = vmatpush1.msra.mxu0 %v1756
        %1764 = vmatprep.subr.mxu0 0.0
        %1765 = vmatpush1.msra.mxu0 0.0
        %1766 = vmatprep.subr.mxu0 0.0
        %1767 = vmatpush1.msra.mxu0 0.0
        %1768 = vmatprep.subr.mxu0 0.0
        %1769 = vmatpush1.msra.mxu0 0.0
        %1770 = vmatprep.subr.mxu0 0.0
        %1771 = vmatpush1.msra.mxu0 0.0
        %1772 = vmatprep.subr.mxu0 0.0
        %1773 = vmatpush1.msra.mxu0 0.0
        %1774 = vmatprep.subr.mxu0 0.0
        %1775 = vmatpush1.msra.mxu0 0.0
        %1776 = vmatprep.subr.mxu0 0.0
        %1777 = vmatpush1.msra.mxu0 0.0
        %1778 = vmatprep.subr.mxu0 0.0
        %1779 = vmatpush1.msra.mxu0 0.0
        %1780 = vmatprep.subr.mxu0 0.0
        %1781 = vmatpush1.msra.mxu0 0.0
        %1782 = vmatprep.subr.mxu0 0.0
        %1783 = vmatpush1.msra.mxu0 0.0
        %1784 = vmatprep.subr.mxu0 0.0
        %1785 = vmatpush1.msra.mxu0 0.0
        %1786 = vmatprep.subr.mxu0 0.0
        %1787 = vmatpush1.msra.mxu0 0.0
        %1788 = vmatprep.subr.mxu0 0.0
        %1789 = vmatpush1.msra.mxu0 0.0
        %1790 = vmatprep.subr.mxu0 0.0
        %1791 = vmatpush1.msra.mxu0 0.0
        %1792 = vmatprep.subr.mxu0 0.0
        %1793 = vmatpush1.msra.mxu0 0.0
        %1794 = vmatprep.subr.mxu0 0.0
        %1795 = vmatpush1.msra.mxu0 0.0
        %1796 = vmatprep.subr.mxu0 0.0
        %1797 = vmatpush1.msra.mxu0 0.0
        %1798 = vmatprep.subr.mxu0 0.0
        %1799 = vmatpush1.msra.mxu0 0.0
        %1800 = vmatprep.subr.mxu0 0.0
        %1801 = vmatpush1.msra.mxu0 0.0
        %1802 = vmatprep.subr.mxu0 0.0
        %1803 = vmatpush1.msra.mxu0 0.0
        %1804 = vmatprep.subr.mxu0 0.0
        %1805 = vmatpush1.msra.mxu0 0.0
        %1806 = vmatprep.subr.mxu0 0.0
        %1807 = vmatpush1.msra.mxu0 0.0
        %1808 = vmatprep.subr.mxu0 0.0
        %1809 = vmatpush1.msra.mxu0 0.0
        %1810 = vmatprep.subr.mxu0 0.0
        %1811 = vmatpush1.msra.mxu0 0.0
        %1812 = vmatprep.subr.mxu0 0.0
        %1813 = vmatpush1.msra.mxu0 0.0
        %1814 = vmatprep.subr.mxu0 0.0
        %1815 = vmatpush1.msra.mxu0 0.0
        %1816 = vmatprep.subr.mxu0 0.0
        %1817 = vmatpush1.msra.mxu0 0.0
        %1818 = vmatprep.subr.mxu0 0.0
        %1819 = vmatpush1.msra.mxu0 0.0
        %1820 = vmatprep.subr.mxu0 0.0
        %1821 = vmatpush1.msra.mxu0 0.0
        %1822 = vmatprep.mubr.f32.mxu0 0.0
        %1823 = vmatmul.mubr.f32.gmra.mrb[0].mxu0 %v1731
        %v1824 = vpop.f32.mrb[0].mxu0
        %v1825 = vadd.f32 0.0, %v1824
        %v1826 = vpop.f32.mrb[0].mxu0
        %1827 = vmatprep.mubr.f32.mxu0 0.0
        %1828 = vmatmul.mubr.f32.gmra.mrb[0].mxu0 %v1734
        %v1829 = vpop.f32.mrb[0].mxu0
        %v1830 = vadd.f32 0.0, %v1829
        %v1831 = vpop.f32.mrb[0].mxu0
        %1832 = vmatprep.mubr.f32.mxu0 0.0
        %1833 = vmatmul.mubr.f32.gmra.mrb[0].mxu0 %v1737
        %v1834 = vpop.f32.mrb[0].mxu0
        %v1835 = vadd.f32 0.0, %v1834
        %v1836 = vpop.f32.mrb[0].mxu0
        %1837 = vmatprep.mubr.f32.mxu0 0.0
        %1838 = vmatmul.mubr.f32.gmra.mrb[0].mxu0 %v1740
        %v1839 = vpop.f32.mrb[0].mxu0
        %v1840 = vadd.f32 0.0, %v1839
        %v1841 = vpop.f32.mrb[0].mxu0
        %1842 = vmatprep.mubr.f32.mxu0 0.0
        %1843 = vmatmul.mubr.f32.gmra.mrb[0].mxu0 %v1743
        %v1844 = vpop.f32.mrb[0].mxu0
        %v1845 = vadd.f32 0.0, %v1844
        %v1846 = vpop.f32.mrb[0].mxu0
        %1847 = vmatprep.mubr.f32.mxu0 0.0
        %1848 = vmatmul.mubr.f32.gmra.mrb[0].mxu0 %v1746
        %v1849 = vpop.f32.mrb[0].mxu0
        %v1850 = vadd.f32 0.0, %v1849
        %v1851 = vpop.f32.mrb[0].mxu0
        %1852 = vmatprep.mubr.f32.mxu0 0.0
        %1853 = vmatmul.mubr.f32.gmra.mrb[0].mxu0 %v1749
        %v1854 = vpop.f32.mrb[0].mxu0
        %v1855 = vadd.f32 0.0, %v1854
        %v1856 = vpop.f32.mrb[0].mxu0
        %1857 = vmatprep.mubr.f32.mxu0 0.0
        %1858 = vmatmul.mubr.f32.gmra.mrb[0].mxu0 %v1752
        %v1859 = vpop.f32.mrb[0].mxu0
        %v1860 = vadd.f32 0.0, %v1859
        %v1861 = vpop.f32.mrb[0].mxu0
        %1862 = vdwg.mxu0
        %v1863 = vld [vmem:[%s12] sm:$0xff]
        %v1864 = vld [vmem:[%s12 + $0x8] sm:$0xff]
        %v1865 = vld [vmem:[%s12 + $0x10] sm:$0xff]
        %v1866 = vld [vmem:[%s12 + $0x18] sm:$0xff]
        %v1867 = vld [vmem:[%s12 + $0x20] sm:$0xff]
        %v1868 = vld [vmem:[%s12 + $0x28] sm:$0x1]
        %v1869 = vld [vmem:[%s12 + $0x30] sm:$0x1]
        %v1870 = vld [vmem:[%s12 + $0x38] sm:$0x1]
        %v1871 = vld [vmem:[%s12 + $0x40] sm:$0x1]
        %v1872 = vld [vmem:[%s12 + $0x48] sm:$0x1]
        %vm1873 = vcmask 72704
        %v1875 = vsel %vm1873, %v1825, 0
        %v1878 = vsel %vm1873, %v1830, 0
        %v1881 = vsel %vm1873, %v1835, 0
        %v1884 = vsel %vm1873, %v1840, 0
        %v1887 = vsel %vm1873, %v1845, 0
        %v1890 = vsel %vm1873, %v1850, 0
        %v1893 = vsel %vm1873, %v1855, 0
        %v1896 = vsel %vm1873, %v1860, 0
        %vm1898 = vcmask 1040384
        %v1900 = vsel %vm1898, %v1868, 0
        %v1903 = vsel %vm1898, %v1869, 0
        %v1906 = vsel %vm1898, %v1870, 0
        %v1909 = vsel %vm1898, %v1871, 0
        %v1912 = vsel %vm1898, %v1872, 0
        %1914 = vmatprep.subr.mxu0 %v1864
        %1915 = vmatpush1.msra.mxu0 %v1863
        %1916 = vmatprep.subr.mxu0 %v1903
        %1917 = vmatpush1.msra.mxu0 %v1900
        %1918 = vmatprep.subr.mxu0 0.0
        %1919 = vmatpush1.msra.mxu0 0.0
        %1920 = vmatprep.subr.mxu0 0.0
        %1921 = vmatpush1.msra.mxu0 0.0
        %1922 = vmatprep.subr.mxu0 0.0
        %1923 = vmatpush1.msra.mxu0 0.0
        %1924 = vmatprep.subr.mxu0 0.0
        %1925 = vmatpush1.msra.mxu0 0.0
        %1926 = vmatprep.subr.mxu0 0.0
        %1927 = vmatpush1.msra.mxu0 0.0
        %1928 = vmatprep.subr.mxu0 0.0
        %1929 = vmatpush1.msra.mxu0 0.0
        %1930 = vmatprep.subr.mxu0 0.0
        %1931 = vmatpush1.msra.mxu0 0.0
        %1932 = vmatprep.subr.mxu0 0.0
        %1933 = vmatpush1.msra.mxu0 0.0
        %1934 = vmatprep.subr.mxu0 0.0
        %1935 = vmatpush1.msra.mxu0 0.0
        %1936 = vmatprep.subr.mxu0 0.0
        %1937 = vmatpush1.msra.mxu0 0.0
        %1938 = vmatprep.subr.mxu0 0.0
        %1939 = vmatpush1.msra.mxu0 0.0
        %1940 = vmatprep.subr.mxu0 0.0
        %1941 = vmatpush1.msra.mxu0 0.0
        %1942 = vmatprep.subr.mxu0 0.0
        %1943 = vmatpush1.msra.mxu0 0.0
        %1944 = vmatprep.subr.mxu0 0.0
        %1945 = vmatpush1.msra.mxu0 0.0
        %1946 = vmatprep.subr.mxu0 0.0
        %1947 = vmatpush1.msra.mxu0 0.0
        %1948 = vmatprep.subr.mxu0 0.0
        %1949 = vmatpush1.msra.mxu0 0.0
        %1950 = vmatprep.subr.mxu0 0.0
        %1951 = vmatpush1.msra.mxu0 0.0
        %1952 = vmatprep.subr.mxu0 0.0
        %1953 = vmatpush1.msra.mxu0 0.0
        %1954 = vmatprep.subr.mxu0 0.0
        %1955 = vmatpush1.msra.mxu0 0.0
        %1956 = vmatprep.subr.mxu0 0.0
        %1957 = vmatpush1.msra.mxu0 0.0
        %1958 = vmatprep.subr.mxu0 0.0
        %1959 = vmatpush1.msra.mxu0 0.0
        %1960 = vmatprep.subr.mxu0 0.0
        %1961 = vmatpush1.msra.mxu0 0.0
        %1962 = vmatprep.subr.mxu0 0.0
        %1963 = vmatpush1.msra.mxu0 0.0
        %1964 = vmatprep.subr.mxu0 0.0
        %1965 = vmatpush1.msra.mxu0 0.0
        %1966 = vmatprep.subr.mxu0 0.0
        %1967 = vmatpush1.msra.mxu0 0.0
        %1968 = vmatprep.subr.mxu0 0.0
        %1969 = vmatpush1.msra.mxu0 0.0
        %1970 = vmatprep.subr.mxu0 0.0
        %1971 = vmatpush1.msra.mxu0 0.0
        %1972 = vmatprep.subr.mxu0 0.0
        %1973 = vmatpush1.msra.mxu0 0.0
        %1974 = vmatprep.subr.mxu0 0.0
        %1975 = vmatpush1.msra.mxu0 0.0
        %1976 = vmatprep.subr.mxu0 0.0
        %1977 = vmatpush1.msra.mxu0 0.0
        %1978 = vmatprep.mubr.f32.mxu0 0.0
        %1979 = vmatmul.mubr.f32.gmra.mrb[0].mxu0 %v1875
        %v1980 = vpop.f32.mrb[0].mxu0
        %v1981 = vadd.f32 0.0, %v1980
        %v1982 = vpop.f32.mrb[0].mxu0
        %v1983 = vadd.f32 0.0, %v1982
        %1984 = vmatprep.mubr.f32.mxu0 0.0
        %1985 = vmatmul.mubr.f32.gmra.mrb[0].mxu0 %v1878
        %v1986 = vpop.f32.mrb[0].mxu0
        %v1987 = vadd.f32 0.0, %v1986
        %v1988 = vpop.f32.mrb[0].mxu0
        %v1989 = vadd.f32 0.0, %v1988
        %1990 = vmatprep.mubr.f32.mxu0 0.0
        %1991 = vmatmul.mubr.f32.gmra.mrb[0].mxu0 %v1881
        %v1992 = vpop.f32.mrb[0].mxu0
        %v1993 = vadd.f32 0.0, %v1992
        %v1994 = vpop.f32.mrb[0].mxu0
        %v1995 = vadd.f32 0.0, %v1994
        %1996 = vmatprep.mubr.f32.mxu0 0.0
        %1997 = vmatmul.mubr.f32.gmra.mrb[0].mxu0 %v1884
        %v1998 = vpop.f32.mrb[0].mxu0
        %v1999 = vadd.f32 0.0, %v1998
        %v2000 = vpop.f32.mrb[0].mxu0
        %v2001 = vadd.f32 0.0, %v2000
        %2002 = vmatprep.mubr.f32.mxu0 0.0
        %2003 = vmatmul.mubr.f32.gmra.mrb[0].mxu0 %v1887
        %v2004 = vpop.f32.mrb[0].mxu0
        %v2005 = vadd.f32 0.0, %v2004
        %v2006 = vpop.f32.mrb[0].mxu0
        %v2007 = vadd.f32 0.0, %v2006
        %2008 = vmatprep.mubr.f32.mxu0 0.0
        %2009 = vmatmul.mubr.f32.gmra.mrb[0].mxu0 %v1890
        %v2010 = vpop.f32.mrb[0].mxu0
        %v2011 = vadd.f32 0.0, %v2010
        %v2012 = vpop.f32.mrb[0].mxu0
        %v2013 = vadd.f32 0.0, %v2012
        %2014 = vmatprep.mubr.f32.mxu0 0.0
        %2015 = vmatmul.mubr.f32.gmra.mrb[0].mxu0 %v1893
        %v2016 = vpop.f32.mrb[0].mxu0
        %v2017 = vadd.f32 0.0, %v2016
        %v2018 = vpop.f32.mrb[0].mxu0
        %v2019 = vadd.f32 0.0, %v2018
        %2020 = vmatprep.mubr.f32.mxu0 0.0
        %2021 = vmatmul.mubr.f32.gmra.mrb[0].mxu0 %v1896
        %v2022 = vpop.f32.mrb[0].mxu0
        %v2023 = vadd.f32 0.0, %v2022
        %v2024 = vpop.f32.mrb[0].mxu0
        %v2025 = vadd.f32 0.0, %v2024
        %2026 = vdwg.mxu0
        %2027 = vmatprep.subr.mxu0 %v1866
        %2028 = vmatpush1.msra.mxu0 %v1865
        %2029 = vmatprep.subr.mxu0 %v1909
        %2030 = vmatpush1.msra.mxu0 %v1906
        %2031 = vmatprep.subr.mxu0 0.0
        %2032 = vmatpush1.msra.mxu0 0.0
        %2033 = vmatprep.subr.mxu0 0.0
        %2034 = vmatpush1.msra.mxu0 0.0
        %2035 = vmatprep.subr.mxu0 0.0
        %2036 = vmatpush1.msra.mxu0 0.0
        %2037 = vmatprep.subr.mxu0 0.0
        %2038 = vmatpush1.msra.mxu0 0.0
        %2039 = vmatprep.subr.mxu0 0.0
        %2040 = vmatpush1.msra.mxu0 0.0
        %2041 = vmatprep.subr.mxu0 0.0
        %2042 = vmatpush1.msra.mxu0 0.0
        %2043 = vmatprep.subr.mxu0 0.0
        %2044 = vmatpush1.msra.mxu0 0.0
        %2045 = vmatprep.subr.mxu0 0.0
        %2046 = vmatpush1.msra.mxu0 0.0
        %2047 = vmatprep.subr.mxu0 0.0
        %2048 = vmatpush1.msra.mxu0 0.0
        %2049 = vmatprep.subr.mxu0 0.0
        %2050 = vmatpush1.msra.mxu0 0.0
        %2051 = vmatprep.subr.mxu0 0.0
        %2052 = vmatpush1.msra.mxu0 0.0
        %2053 = vmatprep.subr.mxu0 0.0
        %2054 = vmatpush1.msra.mxu0 0.0
        %2055 = vmatprep.subr.mxu0 0.0
        %2056 = vmatpush1.msra.mxu0 0.0
        %2057 = vmatprep.subr.mxu0 0.0
        %2058 = vmatpush1.msra.mxu0 0.0
        %2059 = vmatprep.subr.mxu0 0.0
        %2060 = vmatpush1.msra.mxu0 0.0
        %2061 = vmatprep.subr.mxu0 0.0
        %2062 = vmatpush1.msra.mxu0 0.0
        %2063 = vmatprep.subr.mxu0 0.0
        %2064 = vmatpush1.msra.mxu0 0.0
        %2065 = vmatprep.subr.mxu0 0.0
        %2066 = vmatpush1.msra.mxu0 0.0
        %2067 = vmatprep.subr.mxu0 0.0
        %2068 = vmatpush1.msra.mxu0 0.0
        %2069 = vmatprep.subr.mxu0 0.0
        %2070 = vmatpush1.msra.mxu0 0.0
        %2071 = vmatprep.subr.mxu0 0.0
        %2072 = vmatpush1.msra.mxu0 0.0
        %2073 = vmatprep.subr.mxu0 0.0
        %2074 = vmatpush1.msra.mxu0 0.0
        %2075 = vmatprep.subr.mxu0 0.0
        %2076 = vmatpush1.msra.mxu0 0.0
        %2077 = vmatprep.subr.mxu0 0.0
        %2078 = vmatpush1.msra.mxu0 0.0
        %2079 = vmatprep.subr.mxu0 0.0
        %2080 = vmatpush1.msra.mxu0 0.0
        %2081 = vmatprep.subr.mxu0 0.0
        %2082 = vmatpush1.msra.mxu0 0.0
        %2083 = vmatprep.subr.mxu0 0.0
        %2084 = vmatpush1.msra.mxu0 0.0
        %2085 = vmatprep.subr.mxu0 0.0
        %2086 = vmatpush1.msra.mxu0 0.0
        %2087 = vmatprep.subr.mxu0 0.0
        %2088 = vmatpush1.msra.mxu0 0.0
        %2089 = vmatprep.subr.mxu0 0.0
        %2090 = vmatpush1.msra.mxu0 0.0
        %2091 = vmatprep.mubr.f32.mxu0 0.0
        %2092 = vmatmul.mubr.f32.gmra.mrb[0].mxu0 %v1875
        %v2093 = vpop.f32.mrb[0].mxu0
        %v2094 = vadd.f32 0.0, %v2093
        %v2095 = vpop.f32.mrb[0].mxu0
        %v2096 = vadd.f32 0.0, %v2095
        %2097 = vmatprep.mubr.f32.mxu0 0.0
        %2098 = vmatmul.mubr.f32.gmra.mrb[0].mxu0 %v1878
        %v2099 = vpop.f32.mrb[0].mxu0
        %v2100 = vadd.f32 0.0, %v2099
        %v2101 = vpop.f32.mrb[0].mxu0
        %v2102 = vadd.f32 0.0, %v2101
        %2103 = vmatprep.mubr.f32.mxu0 0.0
        %2104 = vmatmul.mubr.f32.gmra.mrb[0].mxu0 %v1881
        %v2105 = vpop.f32.mrb[0].mxu0
        %v2106 = vadd.f32 0.0, %v2105
        %v2107 = vpop.f32.mrb[0].mxu0
        %v2108 = vadd.f32 0.0, %v2107
        %2109 = vmatprep.mubr.f32.mxu0 0.0
        %2110 = vmatmul.mubr.f32.gmra.mrb[0].mxu0 %v1884
        %v2111 = vpop.f32.mrb[0].mxu0
        %v2112 = vadd.f32 0.0, %v2111
        %v2113 = vpop.f32.mrb[0].mxu0
        %v2114 = vadd.f32 0.0, %v2113
        %2115 = vmatprep.mubr.f32.mxu0 0.0
        %2116 = vmatmul.mubr.f32.gmra.mrb[0].mxu0 %v1887
        %v2117 = vpop.f32.mrb[0].mxu0
        %v2118 = vadd.f32 0.0, %v2117
        %v2119 = vpop.f32.mrb[0].mxu0
        %v2120 = vadd.f32 0.0, %v2119
        %2121 = vmatprep.mubr.f32.mxu0 0.0
        %2122 = vmatmul.mubr.f32.gmra.mrb[0].mxu0 %v1890
        %v2123 = vpop.f32.mrb[0].mxu0
        %v2124 = vadd.f32 0.0, %v2123
        %v2125 = vpop.f32.mrb[0].mxu0
        %v2126 = vadd.f32 0.0, %v2125
        %2127 = vmatprep.mubr.f32.mxu0 0.0
        %2128 = vmatmul.mubr.f32.gmra.mrb[0].mxu0 %v1893
        %v2129 = vpop.f32.mrb[0].mxu0
        %v2130 = vadd.f32 0.0, %v2129
        %v2131 = vpop.f32.mrb[0].mxu0
        %v2132 = vadd.f32 0.0, %v2131
        %2133 = vmatprep.mubr.f32.mxu0 0.0
        %2134 = vmatmul.mubr.f32.gmra.mrb[0].mxu0 %v1896
        %v2135 = vpop.f32.mrb[0].mxu0
        %v2136 = vadd.f32 0.0, %v2135
        %v2137 = vpop.f32.mrb[0].mxu0
        %v2138 = vadd.f32 0.0, %v2137
        %2139 = vdwg.mxu0
        %2140 = vmatprep.subr.mxu0 0.0
        %2141 = vmatpush1.msra.mxu0 %v1867
        %2142 = vmatprep.subr.mxu0 0.0
        %2143 = vmatpush1.msra.mxu0 %v1912
        %2144 = vmatprep.subr.mxu0 0.0
        %2145 = vmatpush1.msra.mxu0 0.0
        %2146 = vmatprep.subr.mxu0 0.0
        %2147 = vmatpush1.msra.mxu0 0.0
        %2148 = vmatprep.subr.mxu0 0.0
        %2149 = vmatpush1.msra.mxu0 0.0
        %2150 = vmatprep.subr.mxu0 0.0
        %2151 = vmatpush1.msra.mxu0 0.0
        %2152 = vmatprep.subr.mxu0 0.0
        %2153 = vmatpush1.msra.mxu0 0.0
        %2154 = vmatprep.subr.mxu0 0.0
        %2155 = vmatpush1.msra.mxu0 0.0
        %2156 = vmatprep.subr.mxu0 0.0
        %2157 = vmatpush1.msra.mxu0 0.0
        %2158 = vmatprep.subr.mxu0 0.0
        %2159 = vmatpush1.msra.mxu0 0.0
        %2160 = vmatprep.subr.mxu0 0.0
        %2161 = vmatpush1.msra.mxu0 0.0
        %2162 = vmatprep.subr.mxu0 0.0
        %2163 = vmatpush1.msra.mxu0 0.0
        %2164 = vmatprep.subr.mxu0 0.0
        %2165 = vmatpush1.msra.mxu0 0.0
        %2166 = vmatprep.subr.mxu0 0.0
        %2167 = vmatpush1.msra.mxu0 0.0
        %2168 = vmatprep.subr.mxu0 0.0
        %2169 = vmatpush1.msra.mxu0 0.0
        %2170 = vmatprep.subr.mxu0 0.0
        %2171 = vmatpush1.msra.mxu0 0.0
        %2172 = vmatprep.subr.mxu0 0.0
        %2173 = vmatpush1.msra.mxu0 0.0
        %2174 = vmatprep.subr.mxu0 0.0
        %2175 = vmatpush1.msra.mxu0 0.0
        %2176 = vmatprep.subr.mxu0 0.0
        %2177 = vmatpush1.msra.mxu0 0.0
        %2178 = vmatprep.subr.mxu0 0.0
        %2179 = vmatpush1.msra.mxu0 0.0
        %2180 = vmatprep.subr.mxu0 0.0
        %2181 = vmatpush1.msra.mxu0 0.0
        %2182 = vmatprep.subr.mxu0 0.0
        %2183 = vmatpush1.msra.mxu0 0.0
        %2184 = vmatprep.subr.mxu0 0.0
        %2185 = vmatpush1.msra.mxu0 0.0
        %2186 = vmatprep.subr.mxu0 0.0
        %2187 = vmatpush1.msra.mxu0 0.0
        %2188 = vmatprep.subr.mxu0 0.0
        %2189 = vmatpush1.msra.mxu0 0.0
        %2190 = vmatprep.subr.mxu0 0.0
        %2191 = vmatpush1.msra.mxu0 0.0
        %2192 = vmatprep.subr.mxu0 0.0
        %2193 = vmatpush1.msra.mxu0 0.0
        %2194 = vmatprep.subr.mxu0 0.0
        %2195 = vmatpush1.msra.mxu0 0.0
        %2196 = vmatprep.subr.mxu0 0.0
        %2197 = vmatpush1.msra.mxu0 0.0
        %2198 = vmatprep.subr.mxu0 0.0
        %2199 = vmatpush1.msra.mxu0 0.0
        %2200 = vmatprep.subr.mxu0 0.0
        %2201 = vmatpush1.msra.mxu0 0.0
        %2202 = vmatprep.subr.mxu0 0.0
        %2203 = vmatpush1.msra.mxu0 0.0
        %2204 = vmatprep.mubr.f32.mxu0 0.0
        %2205 = vmatmul.mubr.f32.gmra.mrb[0].mxu0 %v1875
        %v2206 = vpop.f32.mrb[0].mxu0
        %v2207 = vadd.f32 0.0, %v2206
        %v2208 = vpop.f32.mrb[0].mxu0
        %2209 = vmatprep.mubr.f32.mxu0 0.0
        %2210 = vmatmul.mubr.f32.gmra.mrb[0].mxu0 %v1878
        %v2211 = vpop.f32.mrb[0].mxu0
        %v2212 = vadd.f32 0.0, %v2211
        %v2213 = vpop.f32.mrb[0].mxu0
        %2214 = vmatprep.mubr.f32.mxu0 0.0
        %2215 = vmatmul.mubr.f32.gmra.mrb[0].mxu0 %v1881
        %v2216 = vpop.f32.mrb[0].mxu0
        %v2217 = vadd.f32 0.0, %v2216
        %v2218 = vpop.f32.mrb[0].mxu0
        %2219 = vmatprep.mubr.f32.mxu0 0.0
        %2220 = vmatmul.mubr.f32.gmra.mrb[0].mxu0 %v1884
        %v2221 = vpop.f32.mrb[0].mxu0
        %v2222 = vadd.f32 0.0, %v2221
        %v2223 = vpop.f32.mrb[0].mxu0
        %2224 = vmatprep.mubr.f32.mxu0 0.0
        %2225 = vmatmul.mubr.f32.gmra.mrb[0].mxu0 %v1887
        %v2226 = vpop.f32.mrb[0].mxu0
        %v2227 = vadd.f32 0.0, %v2226
        %v2228 = vpop.f32.mrb[0].mxu0
        %2229 = vmatprep.mubr.f32.mxu0 0.0
        %2230 = vmatmul.mubr.f32.gmra.mrb[0].mxu0 %v1890
        %v2231 = vpop.f32.mrb[0].mxu0
        %v2232 = vadd.f32 0.0, %v2231
        %v2233 = vpop.f32.mrb[0].mxu0
        %2234 = vmatprep.mubr.f32.mxu0 0.0
        %2235 = vmatmul.mubr.f32.gmra.mrb[0].mxu0 %v1893
        %v2236 = vpop.f32.mrb[0].mxu0
        %v2237 = vadd.f32 0.0, %v2236
        %v2238 = vpop.f32.mrb[0].mxu0
        %2239 = vmatprep.mubr.f32.mxu0 0.0
        %2240 = vmatmul.mubr.f32.gmra.mrb[0].mxu0 %v1896
        %v2241 = vpop.f32.mrb[0].mxu0
        %v2242 = vadd.f32 0.0, %v2241
        %v2243 = vpop.f32.mrb[0].mxu0
        %2244 = vdwg.mxu0
        %v2245 = vld [vmem:[%s13] sm:$0xff]
        %v2246 = vld [vmem:[%s13 + $0x8] sm:$0xff]
        %v2247 = vld [vmem:[%s13 + $0x10] sm:$0xff]
        %v2248 = vld [vmem:[%s13 + $0x18] sm:$0xff]
        %v2249 = vld [vmem:[%s13 + $0x20] sm:$0xff]
        %v2250 = vld [vmem:[%s13 + $0x28] sm:$0xff]
        %v2251 = vld [vmem:[%s13 + $0x30] sm:$0xff]
        %v2252 = vld [vmem:[%s13 + $0x38] sm:$0xff]
        %v2253 = vld [vmem:[%s13 + $0x40] sm:$0xff]
        %v2254 = vld [vmem:[%s13 + $0x48] sm:$0xff]
        %v2255 = vld [vmem:[%s13 + $0x50] sm:$0xff]
        %v2256 = vld [vmem:[%s13 + $0x58] sm:$0xff]
        %v2257 = vld [vmem:[%s13 + $0x60] sm:$0xff]
        %v2258 = vld [vmem:[%s13 + $0x68] sm:$0xff]
        %v2259 = vld [vmem:[%s13 + $0x70] sm:$0xff]
        %v2260 = vld [vmem:[%s13 + $0x78] sm:$0xff]
        %v2261 = vld [vmem:[%s13 + $0x80] sm:$0xff]
        %v2262 = vld [vmem:[%s13 + $0x88] sm:$0xff]
        %v2263 = vld [vmem:[%s13 + $0x90] sm:$0xff]
        %v2264 = vld [vmem:[%s13 + $0x98] sm:$0xff]
        %v2265 = vld [vmem:[%s13 + $0xa0] sm:$0xff]
        %v2266 = vld [vmem:[%s13 + $0xa8] sm:$0xff]
        %v2267 = vld [vmem:[%s13 + $0xb0] sm:$0xff]
        %v2268 = vld [vmem:[%s13 + $0xb8] sm:$0xff]
        %v2269 = vld [vmem:[%s13 + $0xc0] sm:$0xff]
        %v2270 = vld [vmem:[%s13 + $0xc8] sm:$0xff]
        %v2271 = vld [vmem:[%s13 + $0xd0] sm:$0xff]
        %v2272 = vld [vmem:[%s13 + $0xd8] sm:$0xff]
        %v2273 = vld [vmem:[%s13 + $0xe0] sm:$0xff]
        %v2274 = vld [vmem:[%s13 + $0xe8] sm:$0xff]
        %v2275 = vld [vmem:[%s13 + $0xf0] sm:$0xff]
        %v2276 = vld [vmem:[%s13 + $0xf8] sm:$0xff]
        %v2277 = vld [vmem:[%s13 + $0x100] sm:$0xff]
        %v2278 = vld [vmem:[%s13 + $0x108] sm:$0xff]
        %v2279 = vld [vmem:[%s13 + $0x110] sm:$0xff]
        %v2280 = vld [vmem:[%s13 + $0x118] sm:$0xff]
        %v2281 = vld [vmem:[%s13 + $0x120] sm:$0xff]
        %v2282 = vld [vmem:[%s13 + $0x128] sm:$0xff]
        %v2283 = vld [vmem:[%s13 + $0x130] sm:$0xff]
        %v2284 = vld [vmem:[%s13 + $0x138] sm:$0xff]
        %v2285 = vmul.f32 %v1981, %v2245
        %v2286 = vmul.f32 %v1983, %v2246
        %v2287 = vmul.f32 %v2094, %v2247
        %v2288 = vmul.f32 %v2096, %v2248
        %v2289 = vmul.f32 %v2207, %v2249
        %v2290 = vmul.f32 %v1987, %v2250
        %v2291 = vmul.f32 %v1989, %v2251
        %v2292 = vmul.f32 %v2100, %v2252
        %v2293 = vmul.f32 %v2102, %v2253
        %v2294 = vmul.f32 %v2212, %v2254
        %v2295 = vmul.f32 %v1993, %v2255
        %v2296 = vmul.f32 %v1995, %v2256
        %v2297 = vmul.f32 %v2106, %v2257
        %v2298 = vmul.f32 %v2108, %v2258
        %v2299 = vmul.f32 %v2217, %v2259
        %v2300 = vmul.f32 %v1999, %v2260
        %v2301 = vmul.f32 %v2001, %v2261
        %v2302 = vmul.f32 %v2112, %v2262
        %v2303 = vmul.f32 %v2114, %v2263
        %v2304 = vmul.f32 %v2222, %v2264
        %v2305 = vmul.f32 %v2005, %v2265
        %v2306 = vmul.f32 %v2007, %v2266
        %v2307 = vmul.f32 %v2118, %v2267
        %v2308 = vmul.f32 %v2120, %v2268
        %v2309 = vmul.f32 %v2227, %v2269
        %v2310 = vmul.f32 %v2011, %v2270
        %v2311 = vmul.f32 %v2013, %v2271
        %v2312 = vmul.f32 %v2124, %v2272
        %v2313 = vmul.f32 %v2126, %v2273
        %v2314 = vmul.f32 %v2232, %v2274
        %v2315 = vmul.f32 %v2017, %v2275
        %v2316 = vmul.f32 %v2019, %v2276
        %v2317 = vmul.f32 %v2130, %v2277
        %v2318 = vmul.f32 %v2132, %v2278
        %v2319 = vmul.f32 %v2237, %v2279
        %v2320 = vmul.f32 %v2023, %v2280
        %v2321 = vmul.f32 %v2025, %v2281
        %v2322 = vmul.f32 %v2136, %v2282
        %v2323 = vmul.f32 %v2138, %v2283
        %v2324 = vmul.f32 %v2242, %v2284
        %v2325 = vadd.f32 %v2285, %v2290
        %v2326 = vadd.f32 %v2325, %v2295
        %v2327 = vadd.f32 %v2326, %v2300
        %v2328 = vadd.f32 %v2327, %v2305
        %v2329 = vadd.f32 %v2328, %v2310
        %v2330 = vadd.f32 %v2329, %v2315
        %v2331 = vadd.f32 %v2330, %v2320
        %v2332 = vrot.slane %v2331, 4
        %v2333 = vadd.f32 %v2331, %v2332
        %v2334 = vrot.slane %v2333, 2
        %v2335 = vadd.f32 %v2333, %v2334
        %v2336 = vrot.slane %v2335, 1
        %v2337 = vadd.f32 %v2335, %v2336
        %v2338 = vadd.f32 %v2286, %v2291
        %v2339 = vadd.f32 %v2338, %v2296
        %v2340 = vadd.f32 %v2339, %v2301
        %v2341 = vadd.f32 %v2340, %v2306
        %v2342 = vadd.f32 %v2341, %v2311
        %v2343 = vadd.f32 %v2342, %v2316
        %v2344 = vadd.f32 %v2343, %v2321
        %v2345 = vrot.slane %v2344, 4
        %v2346 = vadd.f32 %v2344, %v2345
        %v2347 = vrot.slane %v2346, 2
        %v2348 = vadd.f32 %v2346, %v2347
        %v2349 = vrot.slane %v2348, 1
        %v2350 = vadd.f32 %v2348, %v2349
        %v2351 = vadd.f32 %v2287, %v2292
        %v2352 = vadd.f32 %v2351, %v2297
        %v2353 = vadd.f32 %v2352, %v2302
        %v2354 = vadd.f32 %v2353, %v2307
        %v2355 = vadd.f32 %v2354, %v2312
        %v2356 = vadd.f32 %v2355, %v2317
        %v2357 = vadd.f32 %v2356, %v2322
        %v2358 = vrot.slane %v2357, 4
        %v2359 = vadd.f32 %v2357, %v2358
        %v2360 = vrot.slane %v2359, 2
        %v2361 = vadd.f32 %v2359, %v2360
        %v2362 = vrot.slane %v2361, 1
        %v2363 = vadd.f32 %v2361, %v2362
        %v2364 = vadd.f32 %v2288, %v2293
        %v2365 = vadd.f32 %v2364, %v2298
        %v2366 = vadd.f32 %v2365, %v2303
        %v2367 = vadd.f32 %v2366, %v2308
        %v2368 = vadd.f32 %v2367, %v2313
        %v2369 = vadd.f32 %v2368, %v2318
        %v2370 = vadd.f32 %v2369, %v2323
        %v2371 = vrot.slane %v2370, 4
        %v2372 = vadd.f32 %v2370, %v2371
        %v2373 = vrot.slane %v2372, 2
        %v2374 = vadd.f32 %v2372, %v2373
        %v2375 = vrot.slane %v2374, 1
        %v2376 = vadd.f32 %v2374, %v2375
        %v2377 = vadd.f32 %v2289, %v2294
        %v2378 = vadd.f32 %v2377, %v2299
        %v2379 = vadd.f32 %v2378, %v2304
        %v2380 = vadd.f32 %v2379, %v2309
        %v2381 = vadd.f32 %v2380, %v2314
        %v2382 = vadd.f32 %v2381, %v2319
        %v2383 = vadd.f32 %v2382, %v2324
        %v2384 = vrot.slane %v2383, 4
        %v2385 = vadd.f32 %v2383, %v2384
        %v2386 = vrot.slane %v2385, 2
        %v2387 = vadd.f32 %v2385, %v2386
        %v2388 = vrot.slane %v2387, 1
        %v2389 = vadd.f32 %v2387, %v2388
        %v2390 = vld [vmem:[%s14] sm:$0xff]
        %v2391 = vld [vmem:[%s14 + $0x8] sm:$0xff]
        %v2392 = vld [vmem:[%s14 + $0x10] sm:$0xff]
        %v2393 = vld [vmem:[%s14 + $0x18] sm:$0xff]
        %v2394 = vld [vmem:[%s14 + $0x20] sm:$0xff]
        %v2395 = vld [vmem:[%s14 + $0x28] sm:$0xff]
        %v2396 = vld [vmem:[%s14 + $0x30] sm:$0xff]
        %v2397 = vld [vmem:[%s14 + $0x38] sm:$0xff]
        %v2398 = vld [vmem:[%s14 + $0x40] sm:$0xff]
        %v2399 = vld [vmem:[%s14 + $0x48] sm:$0xff]
        %v2400 = vld [vmem:[%s14 + $0x50] sm:$0xff]
        %v2401 = vld [vmem:[%s14 + $0x58] sm:$0xff]
        %v2402 = vld [vmem:[%s14 + $0x60] sm:$0xff]
        %v2403 = vld [vmem:[%s14 + $0x68] sm:$0xff]
        %v2404 = vld [vmem:[%s14 + $0x70] sm:$0xff]
        %v2405 = vld [vmem:[%s14 + $0x78] sm:$0xff]
        %v2406 = vld [vmem:[%s14 + $0x80] sm:$0xff]
        %v2407 = vld [vmem:[%s14 + $0x88] sm:$0xff]
        %v2408 = vld [vmem:[%s14 + $0x90] sm:$0xff]
        %v2409 = vld [vmem:[%s14 + $0x98] sm:$0xff]
        %v2410 = vld [vmem:[%s14 + $0xa0] sm:$0xff]
        %v2411 = vld [vmem:[%s14 + $0xa8] sm:$0xff]
        %v2412 = vld [vmem:[%s14 + $0xb0] sm:$0xff]
        %v2413 = vld [vmem:[%s14 + $0xb8] sm:$0xff]
        %v2414 = vld [vmem:[%s14 + $0xc0] sm:$0xff]
        %v2415 = vld [vmem:[%s14 + $0xc8] sm:$0xff]
        %v2416 = vld [vmem:[%s14 + $0xd0] sm:$0xff]
        %v2417 = vld [vmem:[%s14 + $0xd8] sm:$0xff]
        %v2418 = vld [vmem:[%s14 + $0xe0] sm:$0xff]
        %v2419 = vld [vmem:[%s14 + $0xe8] sm:$0xff]
        %v2420 = vld [vmem:[%s14 + $0xf0] sm:$0xff]
        %v2421 = vld [vmem:[%s14 + $0xf8] sm:$0xff]
        %v2422 = vld [vmem:[%s14 + $0x100] sm:$0xff]
        %v2423 = vld [vmem:[%s14 + $0x108] sm:$0xff]
        %v2424 = vld [vmem:[%s14 + $0x110] sm:$0xff]
        %v2425 = vld [vmem:[%s14 + $0x118] sm:$0xff]
        %v2426 = vld [vmem:[%s14 + $0x120] sm:$0xff]
        %v2427 = vld [vmem:[%s14 + $0x128] sm:$0xff]
        %v2428 = vld [vmem:[%s14 + $0x130] sm:$0xff]
        %v2429 = vld [vmem:[%s14 + $0x138] sm:$0xff]
        %v2430 = vld [vmem:[%s14 + $0x140] sm:$0xff]
        %v2431 = vld [vmem:[%s14 + $0x148] sm:$0xff]
        %v2432 = vld [vmem:[%s14 + $0x150] sm:$0xff]
        %v2433 = vld [vmem:[%s14 + $0x158] sm:$0xff]
        %v2434 = vld [vmem:[%s14 + $0x160] sm:$0xff]
        %v2435 = vld [vmem:[%s14 + $0x168] sm:$0xff]
        %v2436 = vld [vmem:[%s14 + $0x170] sm:$0xff]
        %v2437 = vld [vmem:[%s14 + $0x178] sm:$0xff]
        %v2438 = vld [vmem:[%s14 + $0x180] sm:$0xff]
        %v2439 = vld [vmem:[%s14 + $0x188] sm:$0xff]
        %v2440 = vld [vmem:[%s14 + $0x190] sm:$0xff]
        %v2441 = vld [vmem:[%s14 + $0x198] sm:$0xff]
        %v2442 = vld [vmem:[%s14 + $0x1a0] sm:$0xff]
        %v2443 = vld [vmem:[%s14 + $0x1a8] sm:$0xff]
        %v2444 = vld [vmem:[%s14 + $0x1b0] sm:$0xff]
        %v2445 = vld [vmem:[%s14 + $0x1b8] sm:$0xff]
        %v2446 = vld [vmem:[%s14 + $0x1c0] sm:$0xff]
        %v2447 = vld [vmem:[%s14 + $0x1c8] sm:$0xff]
        %v2448 = vld [vmem:[%s14 + $0x1d0] sm:$0xff]
        %v2449 = vld [vmem:[%s14 + $0x1d8] sm:$0xff]
        %v2450 = vld [vmem:[%s14 + $0x1e0] sm:$0xff]
        %v2451 = vld [vmem:[%s14 + $0x1e8] sm:$0xff]
        %v2452 = vld [vmem:[%s14 + $0x1f0] sm:$0xff]
        %v2453 = vld [vmem:[%s14 + $0x1f8] sm:$0xff]
        %v2454 = vld [vmem:[%s14 + $0x200] sm:$0xff]
        %v2455 = vld [vmem:[%s14 + $0x208] sm:$0xff]
        %v2456 = vld [vmem:[%s14 + $0x210] sm:$0xff]
        %v2457 = vld [vmem:[%s14 + $0x218] sm:$0xff]
        %v2458 = vld [vmem:[%s14 + $0x220] sm:$0xff]
        %v2459 = vld [vmem:[%s14 + $0x228] sm:$0xff]
        %v2460 = vld [vmem:[%s14 + $0x230] sm:$0xff]
        %v2461 = vld [vmem:[%s14 + $0x238] sm:$0xff]
        %v2462 = vld [vmem:[%s14 + $0x240] sm:$0xff]
        %v2463 = vld [vmem:[%s14 + $0x248] sm:$0xff]
        %v2464 = vld [vmem:[%s14 + $0x250] sm:$0xff]
        %v2465 = vld [vmem:[%s14 + $0x258] sm:$0xff]
        %v2466 = vld [vmem:[%s14 + $0x260] sm:$0xff]
        %v2467 = vld [vmem:[%s14 + $0x268] sm:$0xff]
        %v2468 = vld [vmem:[%s14 + $0x270] sm:$0xff]
        %v2469 = vld [vmem:[%s14 + $0x278] sm:$0xff]
        %v2470 = vld [vmem:[%s15] sm:$0x1]
        %2471 = vmatprep.subr.mxu0 0.0
        %2472 = vmatpush1.msra.mxu0 %v2390
        %2473 = vmatprep.subr.mxu0 0.0
        %2474 = vmatpush1.msra.mxu0 %v2391
        %2475 = vmatprep.subr.mxu0 0.0
        %2476 = vmatpush1.msra.mxu0 %v2392
        %2477 = vmatprep.subr.mxu0 0.0
        %2478 = vmatpush1.msra.mxu0 %v2393
        %2479 = vmatprep.subr.mxu0 0.0
        %2480 = vmatpush1.msra.mxu0 %v2394
        %2481 = vmatprep.subr.mxu0 0.0
        %2482 = vmatpush1.msra.mxu0 %v2395
        %2483 = vmatprep.subr.mxu0 0.0
        %2484 = vmatpush1.msra.mxu0 %v2396
        %2485 = vmatprep.subr.mxu0 0.0
        %2486 = vmatpush1.msra.mxu0 %v2397
        %2487 = vmatprep.subr.mxu0 0.0
        %2488 = vmatpush1.msra.mxu0 %v2398
        %2489 = vmatprep.subr.mxu0 0.0
        %2490 = vmatpush1.msra.mxu0 %v2399
        %2491 = vmatprep.subr.mxu0 0.0
        %2492 = vmatpush1.msra.mxu0 %v2400
        %2493 = vmatprep.subr.mxu0 0.0
        %2494 = vmatpush1.msra.mxu0 %v2401
        %2495 = vmatprep.subr.mxu0 0.0
        %2496 = vmatpush1.msra.mxu0 %v2402
        %2497 = vmatprep.subr.mxu0 0.0
        %2498 = vmatpush1.msra.mxu0 %v2403
        %2499 = vmatprep.subr.mxu0 0.0
        %2500 = vmatpush1.msra.mxu0 %v2404
        %2501 = vmatprep.subr.mxu0 0.0
        %2502 = vmatpush1.msra.mxu0 %v2405
        %2503 = vmatprep.subr.mxu0 0.0
        %2504 = vmatpush1.msra.mxu0 %v2406
        %2505 = vmatprep.subr.mxu0 0.0
        %2506 = vmatpush1.msra.mxu0 %v2407
        %2507 = vmatprep.subr.mxu0 0.0
        %2508 = vmatpush1.msra.mxu0 %v2408
        %2509 = vmatprep.subr.mxu0 0.0
        %2510 = vmatpush1.msra.mxu0 %v2409
        %2511 = vmatprep.subr.mxu0 0.0
        %2512 = vmatpush1.msra.mxu0 %v2410
        %2513 = vmatprep.subr.mxu0 0.0
        %2514 = vmatpush1.msra.mxu0 %v2411
        %2515 = vmatprep.subr.mxu0 0.0
        %2516 = vmatpush1.msra.mxu0 %v2412
        %2517 = vmatprep.subr.mxu0 0.0
        %2518 = vmatpush1.msra.mxu0 %v2413
        %2519 = vmatprep.subr.mxu0 0.0
        %2520 = vmatpush1.msra.mxu0 %v2414
        %2521 = vmatprep.subr.mxu0 0.0
        %2522 = vmatpush1.msra.mxu0 %v2415
        %2523 = vmatprep.subr.mxu0 0.0
        %2524 = vmatpush1.msra.mxu0 %v2416
        %2525 = vmatprep.subr.mxu0 0.0
        %2526 = vmatpush1.msra.mxu0 %v2417
        %2527 = vmatprep.subr.mxu0 0.0
        %2528 = vmatpush1.msra.mxu0 %v2418
        %2529 = vmatprep.subr.mxu0 0.0
        %2530 = vmatpush1.msra.mxu0 %v2419
        %2531 = vmatprep.subr.mxu0 0.0
        %2532 = vmatpush1.msra.mxu0 %v2420
        %2533 = vmatprep.subr.mxu0 0.0
        %2534 = vmatpush1.msra.mxu0 %v2421
        %2535 = vmatprep.mubr.f32.mxu0 %v2350
        %2536 = vmatmul.mubr.f32.gmra.mrb[0].mxu0 %v2337
        %v2537 = vpop.f32.mrb[0].mxu0
        %v2538 = vadd.f32 %v2470, %v2537
        %v2539 = vpop.f32.mrb[0].mxu0
        %2540 = vdwg.mxu0
        %2541 = vmatprep.subr.mxu0 0.0
        %2542 = vmatpush1.msra.mxu0 %v2422
        %2543 = vmatprep.subr.mxu0 0.0
        %2544 = vmatpush1.msra.mxu0 %v2423
        %2545 = vmatprep.subr.mxu0 0.0
        %2546 = vmatpush1.msra.mxu0 %v2424
        %2547 = vmatprep.subr.mxu0 0.0
        %2548 = vmatpush1.msra.mxu0 %v2425
        %2549 = vmatprep.subr.mxu0 0.0
        %2550 = vmatpush1.msra.mxu0 %v2426
        %2551 = vmatprep.subr.mxu0 0.0
        %2552 = vmatpush1.msra.mxu0 %v2427
        %2553 = vmatprep.subr.mxu0 0.0
        %2554 = vmatpush1.msra.mxu0 %v2428
        %2555 = vmatprep.subr.mxu0 0.0
        %2556 = vmatpush1.msra.mxu0 %v2429
        %2557 = vmatprep.subr.mxu0 0.0
        %2558 = vmatpush1.msra.mxu0 %v2430
        %2559 = vmatprep.subr.mxu0 0.0
        %2560 = vmatpush1.msra.mxu0 %v2431
        %2561 = vmatprep.subr.mxu0 0.0
        %2562 = vmatpush1.msra.mxu0 %v2432
        %2563 = vmatprep.subr.mxu0 0.0
        %2564 = vmatpush1.msra.mxu0 %v2433
        %2565 = vmatprep.subr.mxu0 0.0
        %2566 = vmatpush1.msra.mxu0 %v2434
        %2567 = vmatprep.subr.mxu0 0.0
        %2568 = vmatpush1.msra.mxu0 %v2435
        %2569 = vmatprep.subr.mxu0 0.0
        %2570 = vmatpush1.msra.mxu0 %v2436
        %2571 = vmatprep.subr.mxu0 0.0
        %2572 = vmatpush1.msra.mxu0 %v2437
        %2573 = vmatprep.subr.mxu0 0.0
        %2574 = vmatpush1.msra.mxu0 %v2438
        %2575 = vmatprep.subr.mxu0 0.0
        %2576 = vmatpush1.msra.mxu0 %v2439
        %2577 = vmatprep.subr.mxu0 0.0
        %2578 = vmatpush1.msra.mxu0 %v2440
        %2579 = vmatprep.subr.mxu0 0.0
        %2580 = vmatpush1.msra.mxu0 %v2441
        %2581 = vmatprep.subr.mxu0 0.0
        %2582 = vmatpush1.msra.mxu0 %v2442
        %2583 = vmatprep.subr.mxu0 0.0
        %2584 = vmatpush1.msra.mxu0 %v2443
        %2585 = vmatprep.subr.mxu0 0.0
        %2586 = vmatpush1.msra.mxu0 %v2444
        %2587 = vmatprep.subr.mxu0 0.0
        %2588 = vmatpush1.msra.mxu0 %v2445
        %2589 = vmatprep.subr.mxu0 0.0
        %2590 = vmatpush1.msra.mxu0 %v2446
        %2591 = vmatprep.subr.mxu0 0.0
        %2592 = vmatpush1.msra.mxu0 %v2447
        %2593 = vmatprep.subr.mxu0 0.0
        %2594 = vmatpush1.msra.mxu0 %v2448
        %2595 = vmatprep.subr.mxu0 0.0
        %2596 = vmatpush1.msra.mxu0 %v2449
        %2597 = vmatprep.subr.mxu0 0.0
        %2598 = vmatpush1.msra.mxu0 %v2450
        %2599 = vmatprep.subr.mxu0 0.0
        %2600 = vmatpush1.msra.mxu0 %v2451
        %2601 = vmatprep.subr.mxu0 0.0
        %2602 = vmatpush1.msra.mxu0 %v2452
        %2603 = vmatprep.subr.mxu0 0.0
        %2604 = vmatpush1.msra.mxu0 %v2453
        %2605 = vmatprep.mubr.f32.mxu0 %v2376
        %2606 = vmatmul.mubr.f32.gmra.mrb[0].mxu0 %v2363
        %v2607 = vpop.f32.mrb[0].mxu0
        %v2608 = vadd.f32 %v2538, %v2607
        %v2609 = vpop.f32.mrb[0].mxu0
        %2610 = vdwg.mxu0
        %2611 = vmatprep.subr.mxu0 0.0
        %2612 = vmatpush1.msra.mxu0 %v2454
        %2613 = vmatprep.subr.mxu0 0.0
        %2614 = vmatpush1.msra.mxu0 %v2455
        %2615 = vmatprep.subr.mxu0 0.0
        %2616 = vmatpush1.msra.mxu0 %v2456
        %2617 = vmatprep.subr.mxu0 0.0
        %2618 = vmatpush1.msra.mxu0 %v2457
        %2619 = vmatprep.subr.mxu0 0.0
        %2620 = vmatpush1.msra.mxu0 %v2458
        %2621 = vmatprep.subr.mxu0 0.0
        %2622 = vmatpush1.msra.mxu0 %v2459
        %2623 = vmatprep.subr.mxu0 0.0
        %2624 = vmatpush1.msra.mxu0 %v2460
        %2625 = vmatprep.subr.mxu0 0.0
        %2626 = vmatpush1.msra.mxu0 %v2461
        %2627 = vmatprep.subr.mxu0 0.0
        %2628 = vmatpush1.msra.mxu0 %v2462
        %2629 = vmatprep.subr.mxu0 0.0
        %2630 = vmatpush1.msra.mxu0 %v2463
        %2631 = vmatprep.subr.mxu0 0.0
        %2632 = vmatpush1.msra.mxu0 %v2464
        %2633 = vmatprep.subr.mxu0 0.0
        %2634 = vmatpush1.msra.mxu0 %v2465
        %2635 = vmatprep.subr.mxu0 0.0
        %2636 = vmatpush1.msra.mxu0 %v2466
        %2637 = vmatprep.subr.mxu0 0.0
        %2638 = vmatpush1.msra.mxu0 %v2467
        %2639 = vmatprep.subr.mxu0 0.0
        %2640 = vmatpush1.msra.mxu0 %v2468
        %2641 = vmatprep.subr.mxu0 0.0
        %2642 = vmatpush1.msra.mxu0 %v2469
        %2643 = vmatprep.subr.mxu0 0.0
        %2644 = vmatpush1.msra.mxu0 0.0
        %2645 = vmatprep.subr.mxu0 0.0
        %2646 = vmatpush1.msra.mxu0 0.0
        %2647 = vmatprep.subr.mxu0 0.0
        %2648 = vmatpush1.msra.mxu0 0.0
        %2649 = vmatprep.subr.mxu0 0.0
        %2650 = vmatpush1.msra.mxu0 0.0
        %2651 = vmatprep.subr.mxu0 0.0
        %2652 = vmatpush1.msra.mxu0 0.0
        %2653 = vmatprep.subr.mxu0 0.0
        %2654 = vmatpush1.msra.mxu0 0.0
        %2655 = vmatprep.subr.mxu0 0.0
        %2656 = vmatpush1.msra.mxu0 0.0
        %2657 = vmatprep.subr.mxu0 0.0
        %2658 = vmatpush1.msra.mxu0 0.0
        %2659 = vmatprep.subr.mxu0 0.0
        %2660 = vmatpush1.msra.mxu0 0.0
        %2661 = vmatprep.subr.mxu0 0.0
        %2662 = vmatpush1.msra.mxu0 0.0
        %2663 = vmatprep.subr.mxu0 0.0
        %2664 = vmatpush1.msra.mxu0 0.0
        %2665 = vmatprep.subr.mxu0 0.0
        %2666 = vmatpush1.msra.mxu0 0.0
        %2667 = vmatprep.subr.mxu0 0.0
        %2668 = vmatpush1.msra.mxu0 0.0
        %2669 = vmatprep.subr.mxu0 0.0
        %2670 = vmatpush1.msra.mxu0 0.0
        %2671 = vmatprep.subr.mxu0 0.0
        %2672 = vmatpush1.msra.mxu0 0.0
        %2673 = vmatprep.subr.mxu0 0.0
        %2674 = vmatpush1.msra.mxu0 0.0
        %2675 = vmatprep.mubr.f32.mxu0 0.0
        %2676 = vmatmul.mubr.f32.gmra.mrb[0].mxu0 %v2389
        %v2677 = vpop.f32.mrb[0].mxu0
        %v2678 = vadd.f32 %v2608, %v2677
        %v2679 = vpop.f32.mrb[0].mxu0
        %2680 = vdwg.mxu0
        %vm2681 = vcmask 73728
        %2682 = vst.msk [vmem:[%s513] sm:$0x1] %vm2681, %v2678
        %s2683 = sand.u32 %s379, 1
        %s2684 = scalar_lea.sflag [#allocation3], %s2683
        %s2685 = sand.u32 %s379, 1
        %s2686 = scalar_lea.vmem [#allocation2], %s2685
        // Predicated region
        $region85: #{convnet_forward.1} parent=83 // pred_check
          %p2687 = pneg %p389
        $region86: #{convnet_forward.1} parent=83 // pred_check_branch
          %2689 = sbr.rel (%p2687) target = $region88
        $region87: #{convnet_forward.1} parent=83 // pred_region
          %s2691 = ssub.s32 16, 16
          %2692 = vsyncadd %s2684, %s2691
          %s2693 = smul.addr %s30, 16
          %s2694 = scalar_lea.hbm %s16, %s2693
          %s2696 = sshll.u32 %s2686, 4
          %s2697 = int_to_ptr.vmem [resolvable:$true] %s2696
          %2699 = dma.vmem_to_hbm [thread:$0]  %s2697, 16, %s2694, %s2684
        $region88: #{convnet_forward.1} parent=83 // pred_fallthru
          _
      $region84: #{convnet_forward.1} parent=5 // pred_fallthru
        _
      %p2700 = scmp.le.s32.totalorder 2, %s25
      // Predicated region
      $region89: #{convnet_forward.1} parent=5 // pred_check
        %p2701 = pneg %p2700
      $region90: #{convnet_forward.1} parent=5 // pred_check_branch
        %2703 = sbr.rel (%p2701) target = $region92
      $region91: #{convnet_forward.1} parent=5 // pred_region
        %s2704 = ssub.s32 %s25, 2
        // Predicated region
        $region93: #{convnet_forward.1} parent=91 // pred_check
          %p2705 = pneg %p395
        $region94: #{convnet_forward.1} parent=91 // pred_check_branch
          %2707 = sbr.rel (%p2705) target = $region96
        $region95: #{convnet_forward.1} parent=91 // pred_region
          %s2708 = sand.u32 %s380, 1
          %s2709 = scalar_lea.sflag [#allocation3], %s2708
          %s2710 = sand.u32 %s380, 1
          %s2711 = scalar_lea.vmem [#allocation2], %s2710
          %2712 = dma.done %s2709, 16
        $region96: #{convnet_forward.1} parent=91 // pred_fallthru
          _
      $region92: #{convnet_forward.1} parent=5 // pred_fallthru
        _
    $region6: #{convnet_forward.1} parent=1 // loop_footer
      %s29 = sadd.s32 1, %s25
    $region7: #{convnet_forward.1} parent=1 // loop_footer_branch
      %24 = sbr.rel target = $region3
    $region8: #{convnet_forward.1} parent=1 // loop_exit
      _
    %2713 = vsyncpa [#allocation3], 1
    %s2714 = scalar_lea.sflag [#allocation3], 1
    %2715 = vsyncpa %s2714, 1

</llo_original>
